<compile_context>
chip_gen: v6e
topology: v6e:2x2x1
jax: 0.10.0
libtpu: 0.0.40
codegen_flags: <defaults>
</compile_context>

<pallas_src>
import functools

import jax
import jax.numpy as jnp
from jax import lax
from jax.experimental import pallas as pl
from jax.experimental.pallas import tpu as pltpu


def _round_up(x, m):
    return (x + m - 1) // m * m


def _device_kind():
    try:
        return jax.devices()[0].device_kind.lower()
    except Exception:
        return ""


def lstm_kernel(gx_ref, whh_ref, hout_ref, h_ref, c_ref, *,
                seq_len, time_chunk, needs_mask, use_bf16_gates):
    """One (batch-block, time-chunk) grid step of the LSTM recurrence.

    gx_ref  : (Tc, Bb, 4Hp) bf16  precomputed x@W_ih^T + b, gate order [i,f,o,g]
    whh_ref : (Hp, 4Hp)     bf16  hidden->hidden weights (resident, Buffered(1))
    hout_ref: (Bb, Hp)      f32   last hidden state (written on the last chunk)
    h_ref/c_ref : (Bb, Hp)  f32   VMEM scratch carrying state across time chunks

    NOTE: correctness of the h/c scratch carry requires the time axis to remain
    the innermost ("arbitrary") grid axis so every batch block's time chunks run
    consecutively.  Do not reorder the grid.
    """
    t_idx = pl.program_id(1)
    Hp = whh_ref.shape[0]

    @pl.when(t_idx == 0)
    def _():
        h_ref[...] = jnp.zeros_like(h_ref)
        c_ref[...] = jnp.zeros_like(c_ref)

    act_dtype = jnp.bfloat16 if use_bf16_gates else jnp.float32

    def step(t, carry):
        h, c = carry
        h_bf = h.astype(jnp.bfloat16)

        def pre(gate):
            # Gate pre-activation slab (Bb, Hp): static, lane-aligned column
            # slice of the resident W_hh plus the streamed gx slice.
            col = gate * Hp
            acc = jnp.dot(h_bf, whh_ref[:, col:col + Hp],
                          preferred_element_type=jnp.float32)
            return acc + gx_ref[t, :, col:col + Hp].astype(jnp.float32)

        def sig(x):
            # sigmoid(x) = 0.5 * tanh(0.5 * x) + 0.5  -> single EUP op.
            t_ = jnp.tanh((0.5 * x).astype(act_dtype)).astype(jnp.float32)
            return 0.5 * t_ + 0.5

        def tnh(x):
            return jnp.tanh(x.astype(act_dtype)).astype(jnp.float32)

        # Gate order [i, f, o, g]; each slab is consumed as soon as possible so
        # no (Bb, 4Hp) gates tensor is ever materialized.
        i_g = sig(pre(0))
        g_g = tnh(pre(3))
        ig = i_g * g_g
        f_g = sig(pre(1))
        c_new = f_g * c + ig
        o_g = sig(pre(2))
        h_new = o_g * jnp.tanh(c_new)

        if needs_mask:
            # Ragged last time chunk: freeze the state on padded timesteps.
            m = ((t_idx * time_chunk + t) < seq_len).astype(jnp.float32)
            h_new = m * h_new + (1.0 - m) * h
            c_new = m * c_new + (1.0 - m) * c
        return (h_new, c_new)

    unroll = time_chunk if time_chunk <= 8 else 8
    h_last, c_last = lax.fori_loop(0, time_chunk, step,
                                   (h_ref[...], c_ref[...]), unroll=unroll)
    h_ref[...] = h_last
    c_ref[...] = c_last

    @pl.when(t_idx == pl.num_programs(1) - 1)
    def _():
        hout_ref[...] = h_last


# PyTorch nn.LSTM gate order is [i, f, g, o]; the kernel uses [i, f, o, g] so the
# three sigmoid gates are contiguous and the tanh gate is the last slab.
_GATE_ORDER = (0, 1, 3, 2)


def lstm_forward(x, params):
    """x: (B, T, D) batch-first float32. Returns (B, output_size) float32."""
    w_ih, w_hh, b_ih, b_hh, w_out, b_out = params
    B, T, D = x.shape
    H = w_hh.shape[1]
    Hp = _round_up(H, 128)                        # lane-align each gate block

    kind = _device_kind()
    is_v7x = "v7" in kind
    big_vmem = ("v5" in kind) or ("v6" in kind)   # 128 MiB VMEM generations
    use_bf16_gates = ("v6" in kind) or is_v7x     # bf16 EUP path (not on v5e)

    # ---- batch block --------------------------------------------------------
    Bq = _round_up(max(B, 1), 16)                 # bf16 sublane tile
    bb_cap = 128 if ("v5" in kind or not kind) else 256   # 256x256 MXU on v6e/v7x
    Bb = min(bb_cap, Bq)
    if is_v7x and Bq > 16:
        # Guarantee >= 2 batch blocks so both v7x TensorCores get work.
        Bb = min(Bb, _round_up((Bq + 1) // 2, 16))
    Bp = _round_up(B, Bb)

    # ---- time chunk from a per-generation VMEM budget -----------------------
    vmem_budget = (100 << 20) if (big_vmem and not is_v7x) else (48 << 20)
    whh_bytes = Hp * 4 * Hp * 2                   # bf16, single copy (Buffered(1))
    state_bytes = 2 * Bb * Hp * 4                 # h, c scratch
    out_bytes = 2 * Bb * Hp * 4                   # double-buffered output block
    reserve = 4 << 20
    avail = vmem_budget - whh_bytes - state_bytes - out_bytes - reserve
    per_step = 2 * Bb * 4 * Hp * 2                # double-buffered bf16 gx per t
    Tc = int(max(1, min(T, 64, avail // per_step)))
    n_tc = pl.cdiv(T, Tc)
    Tp = n_tc * Tc
    needs_mask = Tp != T

    # ---- weight / bias preprocessing (gate reorder + pad) -------------------
    def reorder_pad_cols(w_t):       # (K, 4H) -> (K, 4Hp), gate order [i,f,o,g]
        blocks = [w_t[:, g * H:(g + 1) * H] for g in _GATE_ORDER]
        return jnp.concatenate(
            [jnp.pad(blk, ((0, 0), (0, Hp - H))) for blk in blocks], axis=1)

    wih_p = reorder_pad_cols(jnp.transpose(w_ih))                       # (D, 4Hp) f32
    whh_p = jnp.pad(reorder_pad_cols(jnp.transpose(w_hh)),
                    ((0, Hp - H), (0, 0))).astype(jnp.bfloat16)         # (Hp, 4Hp)
    bias = jnp.concatenate(
        [jnp.pad((b_ih + b_hh)[g * H:(g + 1) * H], (0, Hp - H))
         for g in _GATE_ORDER])                                         # (4Hp,) f32

    # ---- input projection hoisted out of the kernel (plain XLA) -------------
    # gx = x @ W_ih^T + b, computed in f32, streamed to the kernel as bf16.
    # Padded hidden lanes stay exactly zero (zero weights/bias, zero initial c),
    # and padded batch rows / time steps are sliced off or masked.
    gx = jnp.einsum("btd,dg->btg", x, wih_p) + bias                     # (B, T, 4Hp)
    gx = jnp.transpose(gx, (1, 0, 2))                                   # (T, B, 4Hp)
    gx = jnp.pad(gx, ((0, Tp - T), (0, Bp - B), (0, 0))).astype(jnp.bfloat16)

    grid = (Bp // Bb, n_tc)

    kernel = functools.partial(
        lstm_kernel, seq_len=T, time_chunk=Tc, needs_mask=needs_mask,
        use_bf16_gates=use_bf16_gates)

    h_last = pl.pallas_call(
        kernel,
        out_shape=jax.ShapeDtypeStruct((Bp, Hp), jnp.float32),
        grid=grid,
        in_specs=[
            # streamed gx chunk (double-buffered HBM->VMEM)
            pl.BlockSpec((Tc, Bb, 4 * Hp), lambda b, t: (t, b, 0)),
            # resident hidden->hidden weights: constant block, single buffer
            pl.BlockSpec((Hp, 4 * Hp), lambda b, t: (0, 0),
                         pipeline_mode=pl.Buffered(1)),
        ],
        out_specs=pl.BlockSpec((Bb, Hp), lambda b, t: (b, 0)),
        scratch_shapes=[
            pltpu.VMEM((Bb, Hp), jnp.float32),   # h carry
            pltpu.VMEM((Bb, Hp), jnp.float32),   # c carry
        ],
        compiler_params=pltpu.CompilerParams(
            dimension_semantics=("parallel", "arbitrary"),
            vmem_limit_bytes=vmem_budget,
        ),
    )(gx, whh_p)

    # Final Linear (H -> output_size) folded into the wrapper: output_size is
    # tiny (1), so doing it here avoids a 1-lane masked store in the kernel.
    return h_last[:B, :H] @ jnp.transpose(w_out) + b_out


def make_params(key, input_size, hidden_size, output_size):
    """Deterministic init matching PyTorch shapes: U(-1/sqrt(H), 1/sqrt(H))."""
    ks = jax.random.split(key, 6)
    bound = 1.0 / (hidden_size ** 0.5)
    w_ih = jax.random.uniform(ks[0], (4 * hidden_size, input_size), jnp.float32, -bound, bound)
    w_hh = jax.random.uniform(ks[1], (4 * hidden_size, hidden_size), jnp.float32, -bound, bound)
    b_ih = jax.random.uniform(ks[2], (4 * hidden_size,), jnp.float32, -bound, bound)
    b_hh = jax.random.uniform(ks[3], (4 * hidden_size,), jnp.float32, -bound, bound)
    w_out = jax.random.uniform(ks[4], (output_size, hidden_size), jnp.float32, -bound, bound)
    b_out = jax.random.uniform(ks[5], (output_size,), jnp.float32, -bound, bound)
    return (w_ih, w_hh, b_ih, b_hh, w_out, b_out)


def lstm_forward_ref(x, params):
    """Pure-JAX f32 reference (lax.scan, PyTorch gate order) for checking."""
    w_ih, w_hh, b_ih, b_hh, w_out, b_out = params
    B = x.shape[0]
    H = w_hh.shape[1]

    def step(carry, x_t):
        h, c = carry
        gates = x_t @ w_ih.T + b_ih + h @ w_hh.T + b_hh
        i_g = jax.nn.sigmoid(gates[:, 0 * H:1 * H])
        f_g = jax.nn.sigmoid(gates[:, 1 * H:2 * H])
        g_g = jnp.tanh(gates[:, 2 * H:3 * H])
        o_g = jax.nn.sigmoid(gates[:, 3 * H:4 * H])
        c = f_g * c + i_g * g_g
        h = o_g * jnp.tanh(c)
        return (h, c), None

    h0 = jnp.zeros((B, H), jnp.float32)
    c0 = jnp.zeros((B, H), jnp.float32)
    (h_last, _), _ = lax.scan(step, (h0, c0), jnp.transpose(x, (1, 0, 2)))
    return h_last @ w_out.T + b_out


if __name__ == "__main__":
    batch, seq_len, input_size = 2, 8, 4
    hidden_size, output_size = 64, 1

    key = jax.random.PRNGKey(0)
    k_x, k_p = jax.random.split(key)
    x = jax.random.normal(k_x, (batch, seq_len, input_size), jnp.float32)
    params = make_params(k_p, input_size, hidden_size, output_size)

    out = lstm_forward(x, params)
    out = jax.block_until_ready(out)

    ref = lstm_forward_ref(x, params)
    assert out.shape == (batch, output_size)
    # bf16 matmul inputs / bf16 gx streaming (f32 accumulation & state update)
    # vs f32 reference -> loosened tolerance.
    assert jnp.allclose(out, ref, atol=5e-2, rtol=5e-2), (out, ref)

    print("KERNEL_OK")
</pallas_src>

<mosaic_0001>
module attributes {stable_mosaic.version = 11 : i64} {
  func.func @lstm_kernel(%arg0: i32, %arg1: i32, %arg2: memref<8x16x512xbf16, #tpu.memory_space<vmem>>, %arg3: memref<128x512xbf16, #tpu.memory_space<vmem>>, %arg4: memref<16x128xf32, #tpu.memory_space<vmem>>, %arg5: memref<16x128xf32, #tpu.memory_space<vmem>>, %arg6: memref<16x128xf32, #tpu.memory_space<vmem>>) attributes {dimension_semantics = [#tpu.dimension_semantics<parallel>, #tpu.dimension_semantics<arbitrary>], iteration_bounds = array<i64: 1, 1>, scalar_prefetch = 0 : i64, scratch_operands = 2 : i64, tpu.core_type = #tpu.core_type<tc>, window_params = [{transform_indices = @transform_0, window_bounds = array<i64: 8, 16, 512>}, {pipeline_mode = #tpu.pipeline_mode<synchronous>, transform_indices = @transform_1, window_bounds = array<i64: 128, 512>}, {transform_indices = @transform_2, window_bounds = array<i64: 16, 128>}]} {
    %c0_i32 = arith.constant 0 : i32
    %0 = arith.cmpi eq, %arg1, %c0_i32 : i32
    %1 = arith.extui %0 : i1 to i32
    %c0_i32_0 = arith.constant 0 : i32
    %2 = arith.cmpi ne, %1, %c0_i32_0 : i32
    scf.if %2 {
      %cst_239 = arith.constant 0.000000e+00 : f32
      %458 = vector.broadcast %cst_239 : f32 to vector<16x128xf32>
      %c0_240 = arith.constant 0 : index
      %c0_241 = arith.constant 0 : index
      %459 = vector.load %arg5[%c0_240, %c0_241] : memref<16x128xf32, #tpu.memory_space<vmem>>, vector<16x128xf32>
      tpu.vector_store %arg5[%c0_240, %c0_241], %458 {strides = array<i32>} : memref<16x128xf32, #tpu.memory_space<vmem>>, vector<16x128xf32>,
      %cst_242 = arith.constant 0.000000e+00 : f32
      %460 = vector.broadcast %cst_242 : f32 to vector<16x128xf32>
      %c0_243 = arith.constant 0 : index
      %c0_244 = arith.constant 0 : index
      %461 = vector.load %arg6[%c0_243, %c0_244] : memref<16x128xf32, #tpu.memory_space<vmem>>, vector<16x128xf32>
      tpu.vector_store %arg6[%c0_243, %c0_244], %460 {strides = array<i32>} : memref<16x128xf32, #tpu.memory_space<vmem>>, vector<16x128xf32>,
    } else {
    }
    %c0 = arith.constant 0 : index
    %c0_1 = arith.constant 0 : index
    %3 = vector.load %arg5[%c0, %c0_1] : memref<16x128xf32, #tpu.memory_space<vmem>>, vector<16x128xf32>
    %c0_2 = arith.constant 0 : index
    %c0_3 = arith.constant 0 : index
    %4 = vector.load %arg6[%c0_2, %c0_3] : memref<16x128xf32, #tpu.memory_space<vmem>>, vector<16x128xf32>
    %c0_i32_4 = arith.constant 0 : i32
    %5 = arith.truncf %3 : vector<16x128xf32> to vector<16x128xbf16>
    %c0_5 = arith.constant 0 : index
    %c0_6 = arith.constant 0 : index
    %6 = vector.load %arg3[%c0_5, %c0_6] : memref<128x512xbf16, #tpu.memory_space<vmem>>, vector<128x128xbf16>
    %cst = arith.constant dense<0.000000e+00> : vector<16x128xf32>
    %7 = tpu.matmul %5, %6, %cst {dimension_numbers = #tpu.dot_dimension_numbers<[1], [0], [0], [1], [0, 0, 1, 1], [], []>} : vector<16x128xbf16>, vector<128x128xbf16>, vector<16x128xf32> -> vector<16x128xf32>
    %8 = arith.index_cast %c0_i32_4 : i32 to index
    %c0_7 = arith.constant 0 : index
    %c0_8 = arith.constant 0 : index
    %9 = vector.load %arg2[%8, %c0_7, %c0_8] : memref<8x16x512xbf16, #tpu.memory_space<vmem>>, vector<1x16x128xbf16>
    %10 = vector.shape_cast %9 : vector<1x16x128xbf16> to vector<16x128xbf16>
    %11 = arith.extf %10 : vector<16x128xbf16> to vector<16x128xf32>
    %12 = arith.addf %7, %11 : vector<16x128xf32>
    %cst_9 = arith.constant 5.000000e-01 : f32
    %13 = vector.broadcast %cst_9 : f32 to vector<16x128xf32>
    %14 = arith.mulf %13, %12 : vector<16x128xf32>
    %15 = math.tanh %14 : vector<16x128xf32>
    %cst_10 = arith.constant 5.000000e-01 : f32
    %16 = vector.broadcast %cst_10 : f32 to vector<16x128xf32>
    %17 = arith.mulf %16, %15 : vector<16x128xf32>
    %cst_11 = arith.constant 5.000000e-01 : f32
    %18 = vector.broadcast %cst_11 : f32 to vector<16x128xf32>
    %19 = arith.addf %17, %18 : vector<16x128xf32>
    %c0_12 = arith.constant 0 : index
    %c384 = arith.constant 384 : index
    %20 = vector.load %arg3[%c0_12, %c384] : memref<128x512xbf16, #tpu.memory_space<vmem>>, vector<128x128xbf16>
    %cst_13 = arith.constant dense<0.000000e+00> : vector<16x128xf32>
    %21 = tpu.matmul %5, %20, %cst_13 {dimension_numbers = #tpu.dot_dimension_numbers<[1], [0], [0], [1], [0, 0, 1, 1], [], []>} : vector<16x128xbf16>, vector<128x128xbf16>, vector<16x128xf32> -> vector<16x128xf32>
    %22 = arith.index_cast %c0_i32_4 : i32 to index
    %c0_14 = arith.constant 0 : index
    %c384_15 = arith.constant 384 : index
    %23 = vector.load %arg2[%22, %c0_14, %c384_15] : memref<8x16x512xbf16, #tpu.memory_space<vmem>>, vector<1x16x128xbf16>
    %24 = vector.shape_cast %23 : vector<1x16x128xbf16> to vector<16x128xbf16>
    %25 = arith.extf %24 : vector<16x128xbf16> to vector<16x128xf32>
    %26 = arith.addf %21, %25 : vector<16x128xf32>
    %27 = math.tanh %26 : vector<16x128xf32>
    %28 = arith.mulf %19, %27 : vector<16x128xf32>
    %c0_16 = arith.constant 0 : index
    %c128 = arith.constant 128 : index
    %29 = vector.load %arg3[%c0_16, %c128] : memref<128x512xbf16, #tpu.memory_space<vmem>>, vector<128x128xbf16>
    %cst_17 = arith.constant dense<0.000000e+00> : vector<16x128xf32>
    %30 = tpu.matmul %5, %29, %cst_17 {dimension_numbers = #tpu.dot_dimension_numbers<[1], [0], [0], [1], [0, 0, 1, 1], [], []>} : vector<16x128xbf16>, vector<128x128xbf16>, vector<16x128xf32> -> vector<16x128xf32>
    %31 = arith.index_cast %c0_i32_4 : i32 to index
    %c0_18 = arith.constant 0 : index
    %c128_19 = arith.constant 128 : index
    %32 = vector.load %arg2[%31, %c0_18, %c128_19] : memref<8x16x512xbf16, #tpu.memory_space<vmem>>, vector<1x16x128xbf16>
    %33 = vector.shape_cast %32 : vector<1x16x128xbf16> to vector<16x128xbf16>
    %34 = arith.extf %33 : vector<16x128xbf16> to vector<16x128xf32>
    %35 = arith.addf %30, %34 : vector<16x128xf32>
    %cst_20 = arith.constant 5.000000e-01 : f32
    %36 = vector.broadcast %cst_20 : f32 to vector<16x128xf32>
    %37 = arith.mulf %36, %35 : vector<16x128xf32>
    %38 = math.tanh %37 : vector<16x128xf32>
    %cst_21 = arith.constant 5.000000e-01 : f32
    %39 = vector.broadcast %cst_21 : f32 to vector<16x128xf32>
    %40 = arith.mulf %39, %38 : vector<16x128xf32>
    %cst_22 = arith.constant 5.000000e-01 : f32
    %41 = vector.broadcast %cst_22 : f32 to vector<16x128xf32>
    %42 = arith.addf %40, %41 : vector<16x128xf32>
    %43 = arith.mulf %42, %4 : vector<16x128xf32>
    %44 = arith.addf %43, %28 : vector<16x128xf32>
    %c0_23 = arith.constant 0 : index
    %c256 = arith.constant 256 : index
    %45 = vector.load %arg3[%c0_23, %c256] : memref<128x512xbf16, #tpu.memory_space<vmem>>, vector<128x128xbf16>
    %cst_24 = arith.constant dense<0.000000e+00> : vector<16x128xf32>
    %46 = tpu.matmul %5, %45, %cst_24 {dimension_numbers = #tpu.dot_dimension_numbers<[1], [0], [0], [1], [0, 0, 1, 1], [], []>} : vector<16x128xbf16>, vector<128x128xbf16>, vector<16x128xf32> -> vector<16x128xf32>
    %47 = arith.index_cast %c0_i32_4 : i32 to index
    %c0_25 = arith.constant 0 : index
    %c256_26 = arith.constant 256 : index
    %48 = vector.load %arg2[%47, %c0_25, %c256_26] : memref<8x16x512xbf16, #tpu.memory_space<vmem>>, vector<1x16x128xbf16>
    %49 = vector.shape_cast %48 : vector<1x16x128xbf16> to vector<16x128xbf16>
    %50 = arith.extf %49 : vector<16x128xbf16> to vector<16x128xf32>
    %51 = arith.addf %46, %50 : vector<16x128xf32>
    %cst_27 = arith.constant 5.000000e-01 : f32
    %52 = vector.broadcast %cst_27 : f32 to vector<16x128xf32>
    %53 = arith.mulf %52, %51 : vector<16x128xf32>
    %54 = math.tanh %53 : vector<16x128xf32>
    %cst_28 = arith.constant 5.000000e-01 : f32
    %55 = vector.broadcast %cst_28 : f32 to vector<16x128xf32>
    %56 = arith.mulf %55, %54 : vector<16x128xf32>
    %cst_29 = arith.constant 5.000000e-01 : f32
    %57 = vector.broadcast %cst_29 : f32 to vector<16x128xf32>
    %58 = arith.addf %56, %57 : vector<16x128xf32>
    %59 = math.tanh %44 : vector<16x128xf32>
    %60 = arith.mulf %58, %59 : vector<16x128xf32>
    %c1_i32 = arith.constant 1 : i32
    %61 = arith.truncf %60 : vector<16x128xf32> to vector<16x128xbf16>
    %c0_30 = arith.constant 0 : index
    %c0_31 = arith.constant 0 : index
    %62 = vector.load %arg3[%c0_30, %c0_31] : memref<128x512xbf16, #tpu.memory_space<vmem>>, vector<128x128xbf16>
    %cst_32 = arith.constant dense<0.000000e+00> : vector<16x128xf32>
    %63 = tpu.matmul %61, %62, %cst_32 {dimension_numbers = #tpu.dot_dimension_numbers<[1], [0], [0], [1], [0, 0, 1, 1], [], []>} : vector<16x128xbf16>, vector<128x128xbf16>, vector<16x128xf32> -> vector<16x128xf32>
    %64 = arith.index_cast %c1_i32 : i32 to index
    %c0_33 = arith.constant 0 : index
    %c0_34 = arith.constant 0 : index
    %65 = vector.load %arg2[%64, %c0_33, %c0_34] : memref<8x16x512xbf16, #tpu.memory_space<vmem>>, vector<1x16x128xbf16>
    %66 = vector.shape_cast %65 : vector<1x16x128xbf16> to vector<16x128xbf16>
    %67 = arith.extf %66 : vector<16x128xbf16> to vector<16x128xf32>
    %68 = arith.addf %63, %67 : vector<16x128xf32>
    %cst_35 = arith.constant 5.000000e-01 : f32
    %69 = vector.broadcast %cst_35 : f32 to vector<16x128xf32>
    %70 = arith.mulf %69, %68 : vector<16x128xf32>
    %71 = math.tanh %70 : vector<16x128xf32>
    %cst_36 = arith.constant 5.000000e-01 : f32
    %72 = vector.broadcast %cst_36 : f32 to vector<16x128xf32>
    %73 = arith.mulf %72, %71 : vector<16x128xf32>
    %cst_37 = arith.constant 5.000000e-01 : f32
    %74 = vector.broadcast %cst_37 : f32 to vector<16x128xf32>
    %75 = arith.addf %73, %74 : vector<16x128xf32>
    %c0_38 = arith.constant 0 : index
    %c384_39 = arith.constant 384 : index
    %76 = vector.load %arg3[%c0_38, %c384_39] : memref<128x512xbf16, #tpu.memory_space<vmem>>, vector<128x128xbf16>
    %cst_40 = arith.constant dense<0.000000e+00> : vector<16x128xf32>
    %77 = tpu.matmul %61, %76, %cst_40 {dimension_numbers = #tpu.dot_dimension_numbers<[1], [0], [0], [1], [0, 0, 1, 1], [], []>} : vector<16x128xbf16>, vector<128x128xbf16>, vector<16x128xf32> -> vector<16x128xf32>
    %78 = arith.index_cast %c1_i32 : i32 to index
    %c0_41 = arith.constant 0 : index
    %c384_42 = arith.constant 384 : index
    %79 = vector.load %arg2[%78, %c0_41, %c384_42] : memref<8x16x512xbf16, #tpu.memory_space<vmem>>, vector<1x16x128xbf16>
    %80 = vector.shape_cast %79 : vector<1x16x128xbf16> to vector<16x128xbf16>
    %81 = arith.extf %80 : vector<16x128xbf16> to vector<16x128xf32>
    %82 = arith.addf %77, %81 : vector<16x128xf32>
    %83 = math.tanh %82 : vector<16x128xf32>
    %84 = arith.mulf %75, %83 : vector<16x128xf32>
    %c0_43 = arith.constant 0 : index
    %c128_44 = arith.constant 128 : index
    %85 = vector.load %arg3[%c0_43, %c128_44] : memref<128x512xbf16, #tpu.memory_space<vmem>>, vector<128x128xbf16>
    %cst_45 = arith.constant dense<0.000000e+00> : vector<16x128xf32>
    %86 = tpu.matmul %61, %85, %cst_45 {dimension_numbers = #tpu.dot_dimension_numbers<[1], [0], [0], [1], [0, 0, 1, 1], [], []>} : vector<16x128xbf16>, vector<128x128xbf16>, vector<16x128xf32> -> vector<16x128xf32>
    %87 = arith.index_cast %c1_i32 : i32 to index
    %c0_46 = arith.constant 0 : index
    %c128_47 = arith.constant 128 : index
    %88 = vector.load %arg2[%87, %c0_46, %c128_47] : memref<8x16x512xbf16, #tpu.memory_space<vmem>>, vector<1x16x128xbf16>
    %89 = vector.shape_cast %88 : vector<1x16x128xbf16> to vector<16x128xbf16>
    %90 = arith.extf %89 : vector<16x128xbf16> to vector<16x128xf32>
    %91 = arith.addf %86, %90 : vector<16x128xf32>
    %cst_48 = arith.constant 5.000000e-01 : f32
    %92 = vector.broadcast %cst_48 : f32 to vector<16x128xf32>
    %93 = arith.mulf %92, %91 : vector<16x128xf32>
    %94 = math.tanh %93 : vector<16x128xf32>
    %cst_49 = arith.constant 5.000000e-01 : f32
    %95 = vector.broadcast %cst_49 : f32 to vector<16x128xf32>
    %96 = arith.mulf %95, %94 : vector<16x128xf32>
    %cst_50 = arith.constant 5.000000e-01 : f32
    %97 = vector.broadcast %cst_50 : f32 to vector<16x128xf32>
    %98 = arith.addf %96, %97 : vector<16x128xf32>
    %99 = arith.mulf %98, %44 : vector<16x128xf32>
    %100 = arith.addf %99, %84 : vector<16x128xf32>
    %c0_51 = arith.constant 0 : index
    %c256_52 = arith.constant 256 : index
    %101 = vector.load %arg3[%c0_51, %c256_52] : memref<128x512xbf16, #tpu.memory_space<vmem>>, vector<128x128xbf16>
    %cst_53 = arith.constant dense<0.000000e+00> : vector<16x128xf32>
    %102 = tpu.matmul %61, %101, %cst_53 {dimension_numbers = #tpu.dot_dimension_numbers<[1], [0], [0], [1], [0, 0, 1, 1], [], []>} : vector<16x128xbf16>, vector<128x128xbf16>, vector<16x128xf32> -> vector<16x128xf32>
    %103 = arith.index_cast %c1_i32 : i32 to index
    %c0_54 = arith.constant 0 : index
    %c256_55 = arith.constant 256 : index
    %104 = vector.load %arg2[%103, %c0_54, %c256_55] : memref<8x16x512xbf16, #tpu.memory_space<vmem>>, vector<1x16x128xbf16>
    %105 = vector.shape_cast %104 : vector<1x16x128xbf16> to vector<16x128xbf16>
    %106 = arith.extf %105 : vector<16x128xbf16> to vector<16x128xf32>
    %107 = arith.addf %102, %106 : vector<16x128xf32>
    %cst_56 = arith.constant 5.000000e-01 : f32
    %108 = vector.broadcast %cst_56 : f32 to vector<16x128xf32>
    %109 = arith.mulf %108, %107 : vector<16x128xf32>
    %110 = math.tanh %109 : vector<16x128xf32>
    %cst_57 = arith.constant 5.000000e-01 : f32
    %111 = vector.broadcast %cst_57 : f32 to vector<16x128xf32>
    %112 = arith.mulf %111, %110 : vector<16x128xf32>
    %cst_58 = arith.constant 5.000000e-01 : f32
    %113 = vector.broadcast %cst_58 : f32 to vector<16x128xf32>
    %114 = arith.addf %112, %113 : vector<16x128xf32>
    %115 = math.tanh %100 : vector<16x128xf32>
    %116 = arith.mulf %114, %115 : vector<16x128xf32>
    %c2_i32 = arith.constant 2 : i32
    %117 = arith.truncf %116 : vector<16x128xf32> to vector<16x128xbf16>
    %c0_59 = arith.constant 0 : index
    %c0_60 = arith.constant 0 : index
    %118 = vector.load %arg3[%c0_59, %c0_60] : memref<128x512xbf16, #tpu.memory_space<vmem>>, vector<128x128xbf16>
    %cst_61 = arith.constant dense<0.000000e+00> : vector<16x128xf32>
    %119 = tpu.matmul %117, %118, %cst_61 {dimension_numbers = #tpu.dot_dimension_numbers<[1], [0], [0], [1], [0, 0, 1, 1], [], []>} : vector<16x128xbf16>, vector<128x128xbf16>, vector<16x128xf32> -> vector<16x128xf32>
    %120 = arith.index_cast %c2_i32 : i32 to index
    %c0_62 = arith.constant 0 : index
    %c0_63 = arith.constant 0 : index
    %121 = vector.load %arg2[%120, %c0_62, %c0_63] : memref<8x16x512xbf16, #tpu.memory_space<vmem>>, vector<1x16x128xbf16>
    %122 = vector.shape_cast %121 : vector<1x16x128xbf16> to vector<16x128xbf16>
    %123 = arith.extf %122 : vector<16x128xbf16> to vector<16x128xf32>
    %124 = arith.addf %119, %123 : vector<16x128xf32>
    %cst_64 = arith.constant 5.000000e-01 : f32
    %125 = vector.broadcast %cst_64 : f32 to vector<16x128xf32>
    %126 = arith.mulf %125, %124 : vector<16x128xf32>
    %127 = math.tanh %126 : vector<16x128xf32>
    %cst_65 = arith.constant 5.000000e-01 : f32
    %128 = vector.broadcast %cst_65 : f32 to vector<16x128xf32>
    %129 = arith.mulf %128, %127 : vector<16x128xf32>
    %cst_66 = arith.constant 5.000000e-01 : f32
    %130 = vector.broadcast %cst_66 : f32 to vector<16x128xf32>
    %131 = arith.addf %129, %130 : vector<16x128xf32>
    %c0_67 = arith.constant 0 : index
    %c384_68 = arith.constant 384 : index
    %132 = vector.load %arg3[%c0_67, %c384_68] : memref<128x512xbf16, #tpu.memory_space<vmem>>, vector<128x128xbf16>
    %cst_69 = arith.constant dense<0.000000e+00> : vector<16x128xf32>
    %133 = tpu.matmul %117, %132, %cst_69 {dimension_numbers = #tpu.dot_dimension_numbers<[1], [0], [0], [1], [0, 0, 1, 1], [], []>} : vector<16x128xbf16>, vector<128x128xbf16>, vector<16x128xf32> -> vector<16x128xf32>
    %134 = arith.index_cast %c2_i32 : i32 to index
    %c0_70 = arith.constant 0 : index
    %c384_71 = arith.constant 384 : index
    %135 = vector.load %arg2[%134, %c0_70, %c384_71] : memref<8x16x512xbf16, #tpu.memory_space<vmem>>, vector<1x16x128xbf16>
    %136 = vector.shape_cast %135 : vector<1x16x128xbf16> to vector<16x128xbf16>
    %137 = arith.extf %136 : vector<16x128xbf16> to vector<16x128xf32>
    %138 = arith.addf %133, %137 : vector<16x128xf32>
    %139 = math.tanh %138 : vector<16x128xf32>
    %140 = arith.mulf %131, %139 : vector<16x128xf32>
    %c0_72 = arith.constant 0 : index
    %c128_73 = arith.constant 128 : index
    %141 = vector.load %arg3[%c0_72, %c128_73] : memref<128x512xbf16, #tpu.memory_space<vmem>>, vector<128x128xbf16>
    %cst_74 = arith.constant dense<0.000000e+00> : vector<16x128xf32>
    %142 = tpu.matmul %117, %141, %cst_74 {dimension_numbers = #tpu.dot_dimension_numbers<[1], [0], [0], [1], [0, 0, 1, 1], [], []>} : vector<16x128xbf16>, vector<128x128xbf16>, vector<16x128xf32> -> vector<16x128xf32>
    %143 = arith.index_cast %c2_i32 : i32 to index
    %c0_75 = arith.constant 0 : index
    %c128_76 = arith.constant 128 : index
    %144 = vector.load %arg2[%143, %c0_75, %c128_76] : memref<8x16x512xbf16, #tpu.memory_space<vmem>>, vector<1x16x128xbf16>
    %145 = vector.shape_cast %144 : vector<1x16x128xbf16> to vector<16x128xbf16>
    %146 = arith.extf %145 : vector<16x128xbf16> to vector<16x128xf32>
    %147 = arith.addf %142, %146 : vector<16x128xf32>
    %cst_77 = arith.constant 5.000000e-01 : f32
    %148 = vector.broadcast %cst_77 : f32 to vector<16x128xf32>
    %149 = arith.mulf %148, %147 : vector<16x128xf32>
    %150 = math.tanh %149 : vector<16x128xf32>
    %cst_78 = arith.constant 5.000000e-01 : f32
    %151 = vector.broadcast %cst_78 : f32 to vector<16x128xf32>
    %152 = arith.mulf %151, %150 : vector<16x128xf32>
    %cst_79 = arith.constant 5.000000e-01 : f32
    %153 = vector.broadcast %cst_79 : f32 to vector<16x128xf32>
    %154 = arith.addf %152, %153 : vector<16x128xf32>
    %155 = arith.mulf %154, %100 : vector<16x128xf32>
    %156 = arith.addf %155, %140 : vector<16x128xf32>
    %c0_80 = arith.constant 0 : index
    %c256_81 = arith.constant 256 : index
    %157 = vector.load %arg3[%c0_80, %c256_81] : memref<128x512xbf16, #tpu.memory_space<vmem>>, vector<128x128xbf16>
    %cst_82 = arith.constant dense<0.000000e+00> : vector<16x128xf32>
    %158 = tpu.matmul %117, %157, %cst_82 {dimension_numbers = #tpu.dot_dimension_numbers<[1], [0], [0], [1], [0, 0, 1, 1], [], []>} : vector<16x128xbf16>, vector<128x128xbf16>, vector<16x128xf32> -> vector<16x128xf32>
    %159 = arith.index_cast %c2_i32 : i32 to index
    %c0_83 = arith.constant 0 : index
    %c256_84 = arith.constant 256 : index
    %160 = vector.load %arg2[%159, %c0_83, %c256_84] : memref<8x16x512xbf16, #tpu.memory_space<vmem>>, vector<1x16x128xbf16>
    %161 = vector.shape_cast %160 : vector<1x16x128xbf16> to vector<16x128xbf16>
    %162 = arith.extf %161 : vector<16x128xbf16> to vector<16x128xf32>
    %163 = arith.addf %158, %162 : vector<16x128xf32>
    %cst_85 = arith.constant 5.000000e-01 : f32
    %164 = vector.broadcast %cst_85 : f32 to vector<16x128xf32>
    %165 = arith.mulf %164, %163 : vector<16x128xf32>
    %166 = math.tanh %165 : vector<16x128xf32>
    %cst_86 = arith.constant 5.000000e-01 : f32
    %167 = vector.broadcast %cst_86 : f32 to vector<16x128xf32>
    %168 = arith.mulf %167, %166 : vector<16x128xf32>
    %cst_87 = arith.constant 5.000000e-01 : f32
    %169 = vector.broadcast %cst_87 : f32 to vector<16x128xf32>
    %170 = arith.addf %168, %169 : vector<16x128xf32>
    %171 = math.tanh %156 : vector<16x128xf32>
    %172 = arith.mulf %170, %171 : vector<16x128xf32>
    %c3_i32 = arith.constant 3 : i32
    %173 = arith.truncf %172 : vector<16x128xf32> to vector<16x128xbf16>
    %c0_88 = arith.constant 0 : index
    %c0_89 = arith.constant 0 : index
    %174 = vector.load %arg3[%c0_88, %c0_89] : memref<128x512xbf16, #tpu.memory_space<vmem>>, vector<128x128xbf16>
    %cst_90 = arith.constant dense<0.000000e+00> : vector<16x128xf32>
    %175 = tpu.matmul %173, %174, %cst_90 {dimension_numbers = #tpu.dot_dimension_numbers<[1], [0], [0], [1], [0, 0, 1, 1], [], []>} : vector<16x128xbf16>, vector<128x128xbf16>, vector<16x128xf32> -> vector<16x128xf32>
    %176 = arith.index_cast %c3_i32 : i32 to index
    %c0_91 = arith.constant 0 : index
    %c0_92 = arith.constant 0 : index
    %177 = vector.load %arg2[%176, %c0_91, %c0_92] : memref<8x16x512xbf16, #tpu.memory_space<vmem>>, vector<1x16x128xbf16>
    %178 = vector.shape_cast %177 : vector<1x16x128xbf16> to vector<16x128xbf16>
    %179 = arith.extf %178 : vector<16x128xbf16> to vector<16x128xf32>
    %180 = arith.addf %175, %179 : vector<16x128xf32>
    %cst_93 = arith.constant 5.000000e-01 : f32
    %181 = vector.broadcast %cst_93 : f32 to vector<16x128xf32>
    %182 = arith.mulf %181, %180 : vector<16x128xf32>
    %183 = math.tanh %182 : vector<16x128xf32>
    %cst_94 = arith.constant 5.000000e-01 : f32
    %184 = vector.broadcast %cst_94 : f32 to vector<16x128xf32>
    %185 = arith.mulf %184, %183 : vector<16x128xf32>
    %cst_95 = arith.constant 5.000000e-01 : f32
    %186 = vector.broadcast %cst_95 : f32 to vector<16x128xf32>
    %187 = arith.addf %185, %186 : vector<16x128xf32>
    %c0_96 = arith.constant 0 : index
    %c384_97 = arith.constant 384 : index
    %188 = vector.load %arg3[%c0_96, %c384_97] : memref<128x512xbf16, #tpu.memory_space<vmem>>, vector<128x128xbf16>
    %cst_98 = arith.constant dense<0.000000e+00> : vector<16x128xf32>
    %189 = tpu.matmul %173, %188, %cst_98 {dimension_numbers = #tpu.dot_dimension_numbers<[1], [0], [0], [1], [0, 0, 1, 1], [], []>} : vector<16x128xbf16>, vector<128x128xbf16>, vector<16x128xf32> -> vector<16x128xf32>
    %190 = arith.index_cast %c3_i32 : i32 to index
    %c0_99 = arith.constant 0 : index
    %c384_100 = arith.constant 384 : index
    %191 = vector.load %arg2[%190, %c0_99, %c384_100] : memref<8x16x512xbf16, #tpu.memory_space<vmem>>, vector<1x16x128xbf16>
    %192 = vector.shape_cast %191 : vector<1x16x128xbf16> to vector<16x128xbf16>
    %193 = arith.extf %192 : vector<16x128xbf16> to vector<16x128xf32>
    %194 = arith.addf %189, %193 : vector<16x128xf32>
    %195 = math.tanh %194 : vector<16x128xf32>
    %196 = arith.mulf %187, %195 : vector<16x128xf32>
    %c0_101 = arith.constant 0 : index
    %c128_102 = arith.constant 128 : index
    %197 = vector.load %arg3[%c0_101, %c128_102] : memref<128x512xbf16, #tpu.memory_space<vmem>>, vector<128x128xbf16>
    %cst_103 = arith.constant dense<0.000000e+00> : vector<16x128xf32>
    %198 = tpu.matmul %173, %197, %cst_103 {dimension_numbers = #tpu.dot_dimension_numbers<[1], [0], [0], [1], [0, 0, 1, 1], [], []>} : vector<16x128xbf16>, vector<128x128xbf16>, vector<16x128xf32> -> vector<16x128xf32>
    %199 = arith.index_cast %c3_i32 : i32 to index
    %c0_104 = arith.constant 0 : index
    %c128_105 = arith.constant 128 : index
    %200 = vector.load %arg2[%199, %c0_104, %c128_105] : memref<8x16x512xbf16, #tpu.memory_space<vmem>>, vector<1x16x128xbf16>
    %201 = vector.shape_cast %200 : vector<1x16x128xbf16> to vector<16x128xbf16>
    %202 = arith.extf %201 : vector<16x128xbf16> to vector<16x128xf32>
    %203 = arith.addf %198, %202 : vector<16x128xf32>
    %cst_106 = arith.constant 5.000000e-01 : f32
    %204 = vector.broadcast %cst_106 : f32 to vector<16x128xf32>
    %205 = arith.mulf %204, %203 : vector<16x128xf32>
    %206 = math.tanh %205 : vector<16x128xf32>
    %cst_107 = arith.constant 5.000000e-01 : f32
    %207 = vector.broadcast %cst_107 : f32 to vector<16x128xf32>
    %208 = arith.mulf %207, %206 : vector<16x128xf32>
    %cst_108 = arith.constant 5.000000e-01 : f32
    %209 = vector.broadcast %cst_108 : f32 to vector<16x128xf32>
    %210 = arith.addf %208, %209 : vector<16x128xf32>
    %211 = arith.mulf %210, %156 : vector<16x128xf32>
    %212 = arith.addf %211, %196 : vector<16x128xf32>
    %c0_109 = arith.constant 0 : index
    %c256_110 = arith.constant 256 : index
    %213 = vector.load %arg3[%c0_109, %c256_110] : memref<128x512xbf16, #tpu.memory_space<vmem>>, vector<128x128xbf16>
    %cst_111 = arith.constant dense<0.000000e+00> : vector<16x128xf32>
    %214 = tpu.matmul %173, %213, %cst_111 {dimension_numbers = #tpu.dot_dimension_numbers<[1], [0], [0], [1], [0, 0, 1, 1], [], []>} : vector<16x128xbf16>, vector<128x128xbf16>, vector<16x128xf32> -> vector<16x128xf32>
    %215 = arith.index_cast %c3_i32 : i32 to index
    %c0_112 = arith.constant 0 : index
    %c256_113 = arith.constant 256 : index
    %216 = vector.load %arg2[%215, %c0_112, %c256_113] : memref<8x16x512xbf16, #tpu.memory_space<vmem>>, vector<1x16x128xbf16>
    %217 = vector.shape_cast %216 : vector<1x16x128xbf16> to vector<16x128xbf16>
    %218 = arith.extf %217 : vector<16x128xbf16> to vector<16x128xf32>
    %219 = arith.addf %214, %218 : vector<16x128xf32>
    %cst_114 = arith.constant 5.000000e-01 : f32
    %220 = vector.broadcast %cst_114 : f32 to vector<16x128xf32>
    %221 = arith.mulf %220, %219 : vector<16x128xf32>
    %222 = math.tanh %221 : vector<16x128xf32>
    %cst_115 = arith.constant 5.000000e-01 : f32
    %223 = vector.broadcast %cst_115 : f32 to vector<16x128xf32>
    %224 = arith.mulf %223, %222 : vector<16x128xf32>
    %cst_116 = arith.constant 5.000000e-01 : f32
    %225 = vector.broadcast %cst_116 : f32 to vector<16x128xf32>
    %226 = arith.addf %224, %225 : vector<16x128xf32>
    %227 = math.tanh %212 : vector<16x128xf32>
    %228 = arith.mulf %226, %227 : vector<16x128xf32>
    %c4_i32 = arith.constant 4 : i32
    %229 = arith.truncf %228 : vector<16x128xf32> to vector<16x128xbf16>
    %c0_117 = arith.constant 0 : index
    %c0_118 = arith.constant 0 : index
    %230 = vector.load %arg3[%c0_117, %c0_118] : memref<128x512xbf16, #tpu.memory_space<vmem>>, vector<128x128xbf16>
    %cst_119 = arith.constant dense<0.000000e+00> : vector<16x128xf32>
    %231 = tpu.matmul %229, %230, %cst_119 {dimension_numbers = #tpu.dot_dimension_numbers<[1], [0], [0], [1], [0, 0, 1, 1], [], []>} : vector<16x128xbf16>, vector<128x128xbf16>, vector<16x128xf32> -> vector<16x128xf32>
    %232 = arith.index_cast %c4_i32 : i32 to index
    %c0_120 = arith.constant 0 : index
    %c0_121 = arith.constant 0 : index
    %233 = vector.load %arg2[%232, %c0_120, %c0_121] : memref<8x16x512xbf16, #tpu.memory_space<vmem>>, vector<1x16x128xbf16>
    %234 = vector.shape_cast %233 : vector<1x16x128xbf16> to vector<16x128xbf16>
    %235 = arith.extf %234 : vector<16x128xbf16> to vector<16x128xf32>
    %236 = arith.addf %231, %235 : vector<16x128xf32>
    %cst_122 = arith.constant 5.000000e-01 : f32
    %237 = vector.broadcast %cst_122 : f32 to vector<16x128xf32>
    %238 = arith.mulf %237, %236 : vector<16x128xf32>
    %239 = math.tanh %238 : vector<16x128xf32>
    %cst_123 = arith.constant 5.000000e-01 : f32
    %240 = vector.broadcast %cst_123 : f32 to vector<16x128xf32>
    %241 = arith.mulf %240, %239 : vector<16x128xf32>
    %cst_124 = arith.constant 5.000000e-01 : f32
    %242 = vector.broadcast %cst_124 : f32 to vector<16x128xf32>
    %243 = arith.addf %241, %242 : vector<16x128xf32>
    %c0_125 = arith.constant 0 : index
    %c384_126 = arith.constant 384 : index
    %244 = vector.load %arg3[%c0_125, %c384_126] : memref<128x512xbf16, #tpu.memory_space<vmem>>, vector<128x128xbf16>
    %cst_127 = arith.constant dense<0.000000e+00> : vector<16x128xf32>
    %245 = tpu.matmul %229, %244, %cst_127 {dimension_numbers = #tpu.dot_dimension_numbers<[1], [0], [0], [1], [0, 0, 1, 1], [], []>} : vector<16x128xbf16>, vector<128x128xbf16>, vector<16x128xf32> -> vector<16x128xf32>
    %246 = arith.index_cast %c4_i32 : i32 to index
    %c0_128 = arith.constant 0 : index
    %c384_129 = arith.constant 384 : index
    %247 = vector.load %arg2[%246, %c0_128, %c384_129] : memref<8x16x512xbf16, #tpu.memory_space<vmem>>, vector<1x16x128xbf16>
    %248 = vector.shape_cast %247 : vector<1x16x128xbf16> to vector<16x128xbf16>
    %249 = arith.extf %248 : vector<16x128xbf16> to vector<16x128xf32>
    %250 = arith.addf %245, %249 : vector<16x128xf32>
    %251 = math.tanh %250 : vector<16x128xf32>
    %252 = arith.mulf %243, %251 : vector<16x128xf32>
    %c0_130 = arith.constant 0 : index
    %c128_131 = arith.constant 128 : index
    %253 = vector.load %arg3[%c0_130, %c128_131] : memref<128x512xbf16, #tpu.memory_space<vmem>>, vector<128x128xbf16>
    %cst_132 = arith.constant dense<0.000000e+00> : vector<16x128xf32>
    %254 = tpu.matmul %229, %253, %cst_132 {dimension_numbers = #tpu.dot_dimension_numbers<[1], [0], [0], [1], [0, 0, 1, 1], [], []>} : vector<16x128xbf16>, vector<128x128xbf16>, vector<16x128xf32> -> vector<16x128xf32>
    %255 = arith.index_cast %c4_i32 : i32 to index
    %c0_133 = arith.constant 0 : index
    %c128_134 = arith.constant 128 : index
    %256 = vector.load %arg2[%255, %c0_133, %c128_134] : memref<8x16x512xbf16, #tpu.memory_space<vmem>>, vector<1x16x128xbf16>
    %257 = vector.shape_cast %256 : vector<1x16x128xbf16> to vector<16x128xbf16>
    %258 = arith.extf %257 : vector<16x128xbf16> to vector<16x128xf32>
    %259 = arith.addf %254, %258 : vector<16x128xf32>
    %cst_135 = arith.constant 5.000000e-01 : f32
    %260 = vector.broadcast %cst_135 : f32 to vector<16x128xf32>
    %261 = arith.mulf %260, %259 : vector<16x128xf32>
    %262 = math.tanh %261 : vector<16x128xf32>
    %cst_136 = arith.constant 5.000000e-01 : f32
    %263 = vector.broadcast %cst_136 : f32 to vector<16x128xf32>
    %264 = arith.mulf %263, %262 : vector<16x128xf32>
    %cst_137 = arith.constant 5.000000e-01 : f32
    %265 = vector.broadcast %cst_137 : f32 to vector<16x128xf32>
    %266 = arith.addf %264, %265 : vector<16x128xf32>
    %267 = arith.mulf %266, %212 : vector<16x128xf32>
    %268 = arith.addf %267, %252 : vector<16x128xf32>
    %c0_138 = arith.constant 0 : index
    %c256_139 = arith.constant 256 : index
    %269 = vector.load %arg3[%c0_138, %c256_139] : memref<128x512xbf16, #tpu.memory_space<vmem>>, vector<128x128xbf16>
    %cst_140 = arith.constant dense<0.000000e+00> : vector<16x128xf32>
    %270 = tpu.matmul %229, %269, %cst_140 {dimension_numbers = #tpu.dot_dimension_numbers<[1], [0], [0], [1], [0, 0, 1, 1], [], []>} : vector<16x128xbf16>, vector<128x128xbf16>, vector<16x128xf32> -> vector<16x128xf32>
    %271 = arith.index_cast %c4_i32 : i32 to index
    %c0_141 = arith.constant 0 : index
    %c256_142 = arith.constant 256 : index
    %272 = vector.load %arg2[%271, %c0_141, %c256_142] : memref<8x16x512xbf16, #tpu.memory_space<vmem>>, vector<1x16x128xbf16>
    %273 = vector.shape_cast %272 : vector<1x16x128xbf16> to vector<16x128xbf16>
    %274 = arith.extf %273 : vector<16x128xbf16> to vector<16x128xf32>
    %275 = arith.addf %270, %274 : vector<16x128xf32>
    %cst_143 = arith.constant 5.000000e-01 : f32
    %276 = vector.broadcast %cst_143 : f32 to vector<16x128xf32>
    %277 = arith.mulf %276, %275 : vector<16x128xf32>
    %278 = math.tanh %277 : vector<16x128xf32>
    %cst_144 = arith.constant 5.000000e-01 : f32
    %279 = vector.broadcast %cst_144 : f32 to vector<16x128xf32>
    %280 = arith.mulf %279, %278 : vector<16x128xf32>
    %cst_145 = arith.constant 5.000000e-01 : f32
    %281 = vector.broadcast %cst_145 : f32 to vector<16x128xf32>
    %282 = arith.addf %280, %281 : vector<16x128xf32>
    %283 = math.tanh %268 : vector<16x128xf32>
    %284 = arith.mulf %282, %283 : vector<16x128xf32>
    %c5_i32 = arith.constant 5 : i32
    %285 = arith.truncf %284 : vector<16x128xf32> to vector<16x128xbf16>
    %c0_146 = arith.constant 0 : index
    %c0_147 = arith.constant 0 : index
    %286 = vector.load %arg3[%c0_146, %c0_147] : memref<128x512xbf16, #tpu.memory_space<vmem>>, vector<128x128xbf16>
    %cst_148 = arith.constant dense<0.000000e+00> : vector<16x128xf32>
    %287 = tpu.matmul %285, %286, %cst_148 {dimension_numbers = #tpu.dot_dimension_numbers<[1], [0], [0], [1], [0, 0, 1, 1], [], []>} : vector<16x128xbf16>, vector<128x128xbf16>, vector<16x128xf32> -> vector<16x128xf32>
    %288 = arith.index_cast %c5_i32 : i32 to index
    %c0_149 = arith.constant 0 : index
    %c0_150 = arith.constant 0 : index
    %289 = vector.load %arg2[%288, %c0_149, %c0_150] : memref<8x16x512xbf16, #tpu.memory_space<vmem>>, vector<1x16x128xbf16>
    %290 = vector.shape_cast %289 : vector<1x16x128xbf16> to vector<16x128xbf16>
    %291 = arith.extf %290 : vector<16x128xbf16> to vector<16x128xf32>
    %292 = arith.addf %287, %291 : vector<16x128xf32>
    %cst_151 = arith.constant 5.000000e-01 : f32
    %293 = vector.broadcast %cst_151 : f32 to vector<16x128xf32>
    %294 = arith.mulf %293, %292 : vector<16x128xf32>
    %295 = math.tanh %294 : vector<16x128xf32>
    %cst_152 = arith.constant 5.000000e-01 : f32
    %296 = vector.broadcast %cst_152 : f32 to vector<16x128xf32>
    %297 = arith.mulf %296, %295 : vector<16x128xf32>
    %cst_153 = arith.constant 5.000000e-01 : f32
    %298 = vector.broadcast %cst_153 : f32 to vector<16x128xf32>
    %299 = arith.addf %297, %298 : vector<16x128xf32>
    %c0_154 = arith.constant 0 : index
    %c384_155 = arith.constant 384 : index
    %300 = vector.load %arg3[%c0_154, %c384_155] : memref<128x512xbf16, #tpu.memory_space<vmem>>, vector<128x128xbf16>
    %cst_156 = arith.constant dense<0.000000e+00> : vector<16x128xf32>
    %301 = tpu.matmul %285, %300, %cst_156 {dimension_numbers = #tpu.dot_dimension_numbers<[1], [0], [0], [1], [0, 0, 1, 1], [], []>} : vector<16x128xbf16>, vector<128x128xbf16>, vector<16x128xf32> -> vector<16x128xf32>
    %302 = arith.index_cast %c5_i32 : i32 to index
    %c0_157 = arith.constant 0 : index
    %c384_158 = arith.constant 384 : index
    %303 = vector.load %arg2[%302, %c0_157, %c384_158] : memref<8x16x512xbf16, #tpu.memory_space<vmem>>, vector<1x16x128xbf16>
    %304 = vector.shape_cast %303 : vector<1x16x128xbf16> to vector<16x128xbf16>
    %305 = arith.extf %304 : vector<16x128xbf16> to vector<16x128xf32>
    %306 = arith.addf %301, %305 : vector<16x128xf32>
    %307 = math.tanh %306 : vector<16x128xf32>
    %308 = arith.mulf %299, %307 : vector<16x128xf32>
    %c0_159 = arith.constant 0 : index
    %c128_160 = arith.constant 128 : index
    %309 = vector.load %arg3[%c0_159, %c128_160] : memref<128x512xbf16, #tpu.memory_space<vmem>>, vector<128x128xbf16>
    %cst_161 = arith.constant dense<0.000000e+00> : vector<16x128xf32>
    %310 = tpu.matmul %285, %309, %cst_161 {dimension_numbers = #tpu.dot_dimension_numbers<[1], [0], [0], [1], [0, 0, 1, 1], [], []>} : vector<16x128xbf16>, vector<128x128xbf16>, vector<16x128xf32> -> vector<16x128xf32>
    %311 = arith.index_cast %c5_i32 : i32 to index
    %c0_162 = arith.constant 0 : index
    %c128_163 = arith.constant 128 : index
    %312 = vector.load %arg2[%311, %c0_162, %c128_163] : memref<8x16x512xbf16, #tpu.memory_space<vmem>>, vector<1x16x128xbf16>
    %313 = vector.shape_cast %312 : vector<1x16x128xbf16> to vector<16x128xbf16>
    %314 = arith.extf %313 : vector<16x128xbf16> to vector<16x128xf32>
    %315 = arith.addf %310, %314 : vector<16x128xf32>
    %cst_164 = arith.constant 5.000000e-01 : f32
    %316 = vector.broadcast %cst_164 : f32 to vector<16x128xf32>
    %317 = arith.mulf %316, %315 : vector<16x128xf32>
    %318 = math.tanh %317 : vector<16x128xf32>
    %cst_165 = arith.constant 5.000000e-01 : f32
    %319 = vector.broadcast %cst_165 : f32 to vector<16x128xf32>
    %320 = arith.mulf %319, %318 : vector<16x128xf32>
    %cst_166 = arith.constant 5.000000e-01 : f32
    %321 = vector.broadcast %cst_166 : f32 to vector<16x128xf32>
    %322 = arith.addf %320, %321 : vector<16x128xf32>
    %323 = arith.mulf %322, %268 : vector<16x128xf32>
    %324 = arith.addf %323, %308 : vector<16x128xf32>
    %c0_167 = arith.constant 0 : index
    %c256_168 = arith.constant 256 : index
    %325 = vector.load %arg3[%c0_167, %c256_168] : memref<128x512xbf16, #tpu.memory_space<vmem>>, vector<128x128xbf16>
    %cst_169 = arith.constant dense<0.000000e+00> : vector<16x128xf32>
    %326 = tpu.matmul %285, %325, %cst_169 {dimension_numbers = #tpu.dot_dimension_numbers<[1], [0], [0], [1], [0, 0, 1, 1], [], []>} : vector<16x128xbf16>, vector<128x128xbf16>, vector<16x128xf32> -> vector<16x128xf32>
    %327 = arith.index_cast %c5_i32 : i32 to index
    %c0_170 = arith.constant 0 : index
    %c256_171 = arith.constant 256 : index
    %328 = vector.load %arg2[%327, %c0_170, %c256_171] : memref<8x16x512xbf16, #tpu.memory_space<vmem>>, vector<1x16x128xbf16>
    %329 = vector.shape_cast %328 : vector<1x16x128xbf16> to vector<16x128xbf16>
    %330 = arith.extf %329 : vector<16x128xbf16> to vector<16x128xf32>
    %331 = arith.addf %326, %330 : vector<16x128xf32>
    %cst_172 = arith.constant 5.000000e-01 : f32
    %332 = vector.broadcast %cst_172 : f32 to vector<16x128xf32>
    %333 = arith.mulf %332, %331 : vector<16x128xf32>
    %334 = math.tanh %333 : vector<16x128xf32>
    %cst_173 = arith.constant 5.000000e-01 : f32
    %335 = vector.broadcast %cst_173 : f32 to vector<16x128xf32>
    %336 = arith.mulf %335, %334 : vector<16x128xf32>
    %cst_174 = arith.constant 5.000000e-01 : f32
    %337 = vector.broadcast %cst_174 : f32 to vector<16x128xf32>
    %338 = arith.addf %336, %337 : vector<16x128xf32>
    %339 = math.tanh %324 : vector<16x128xf32>
    %340 = arith.mulf %338, %339 : vector<16x128xf32>
    %c6_i32 = arith.constant 6 : i32
    %341 = arith.truncf %340 : vector<16x128xf32> to vector<16x128xbf16>
    %c0_175 = arith.constant 0 : index
    %c0_176 = arith.constant 0 : index
    %342 = vector.load %arg3[%c0_175, %c0_176] : memref<128x512xbf16, #tpu.memory_space<vmem>>, vector<128x128xbf16>
    %cst_177 = arith.constant dense<0.000000e+00> : vector<16x128xf32>
    %343 = tpu.matmul %341, %342, %cst_177 {dimension_numbers = #tpu.dot_dimension_numbers<[1], [0], [0], [1], [0, 0, 1, 1], [], []>} : vector<16x128xbf16>, vector<128x128xbf16>, vector<16x128xf32> -> vector<16x128xf32>
    %344 = arith.index_cast %c6_i32 : i32 to index
    %c0_178 = arith.constant 0 : index
    %c0_179 = arith.constant 0 : index
    %345 = vector.load %arg2[%344, %c0_178, %c0_179] : memref<8x16x512xbf16, #tpu.memory_space<vmem>>, vector<1x16x128xbf16>
    %346 = vector.shape_cast %345 : vector<1x16x128xbf16> to vector<16x128xbf16>
    %347 = arith.extf %346 : vector<16x128xbf16> to vector<16x128xf32>
    %348 = arith.addf %343, %347 : vector<16x128xf32>
    %cst_180 = arith.constant 5.000000e-01 : f32
    %349 = vector.broadcast %cst_180 : f32 to vector<16x128xf32>
    %350 = arith.mulf %349, %348 : vector<16x128xf32>
    %351 = math.tanh %350 : vector<16x128xf32>
    %cst_181 = arith.constant 5.000000e-01 : f32
    %352 = vector.broadcast %cst_181 : f32 to vector<16x128xf32>
    %353 = arith.mulf %352, %351 : vector<16x128xf32>
    %cst_182 = arith.constant 5.000000e-01 : f32
    %354 = vector.broadcast %cst_182 : f32 to vector<16x128xf32>
    %355 = arith.addf %353, %354 : vector<16x128xf32>
    %c0_183 = arith.constant 0 : index
    %c384_184 = arith.constant 384 : index
    %356 = vector.load %arg3[%c0_183, %c384_184] : memref<128x512xbf16, #tpu.memory_space<vmem>>, vector<128x128xbf16>
    %cst_185 = arith.constant dense<0.000000e+00> : vector<16x128xf32>
    %357 = tpu.matmul %341, %356, %cst_185 {dimension_numbers = #tpu.dot_dimension_numbers<[1], [0], [0], [1], [0, 0, 1, 1], [], []>} : vector<16x128xbf16>, vector<128x128xbf16>, vector<16x128xf32> -> vector<16x128xf32>
    %358 = arith.index_cast %c6_i32 : i32 to index
    %c0_186 = arith.constant 0 : index
    %c384_187 = arith.constant 384 : index
    %359 = vector.load %arg2[%358, %c0_186, %c384_187] : memref<8x16x512xbf16, #tpu.memory_space<vmem>>, vector<1x16x128xbf16>
    %360 = vector.shape_cast %359 : vector<1x16x128xbf16> to vector<16x128xbf16>
    %361 = arith.extf %360 : vector<16x128xbf16> to vector<16x128xf32>
    %362 = arith.addf %357, %361 : vector<16x128xf32>
    %363 = math.tanh %362 : vector<16x128xf32>
    %364 = arith.mulf %355, %363 : vector<16x128xf32>
    %c0_188 = arith.constant 0 : index
    %c128_189 = arith.constant 128 : index
    %365 = vector.load %arg3[%c0_188, %c128_189] : memref<128x512xbf16, #tpu.memory_space<vmem>>, vector<128x128xbf16>
    %cst_190 = arith.constant dense<0.000000e+00> : vector<16x128xf32>
    %366 = tpu.matmul %341, %365, %cst_190 {dimension_numbers = #tpu.dot_dimension_numbers<[1], [0], [0], [1], [0, 0, 1, 1], [], []>} : vector<16x128xbf16>, vector<128x128xbf16>, vector<16x128xf32> -> vector<16x128xf32>
    %367 = arith.index_cast %c6_i32 : i32 to index
    %c0_191 = arith.constant 0 : index
    %c128_192 = arith.constant 128 : index
    %368 = vector.load %arg2[%367, %c0_191, %c128_192] : memref<8x16x512xbf16, #tpu.memory_space<vmem>>, vector<1x16x128xbf16>
    %369 = vector.shape_cast %368 : vector<1x16x128xbf16> to vector<16x128xbf16>
    %370 = arith.extf %369 : vector<16x128xbf16> to vector<16x128xf32>
    %371 = arith.addf %366, %370 : vector<16x128xf32>
    %cst_193 = arith.constant 5.000000e-01 : f32
    %372 = vector.broadcast %cst_193 : f32 to vector<16x128xf32>
    %373 = arith.mulf %372, %371 : vector<16x128xf32>
    %374 = math.tanh %373 : vector<16x128xf32>
    %cst_194 = arith.constant 5.000000e-01 : f32
    %375 = vector.broadcast %cst_194 : f32 to vector<16x128xf32>
    %376 = arith.mulf %375, %374 : vector<16x128xf32>
    %cst_195 = arith.constant 5.000000e-01 : f32
    %377 = vector.broadcast %cst_195 : f32 to vector<16x128xf32>
    %378 = arith.addf %376, %377 : vector<16x128xf32>
    %379 = arith.mulf %378, %324 : vector<16x128xf32>
    %380 = arith.addf %379, %364 : vector<16x128xf32>
    %c0_196 = arith.constant 0 : index
    %c256_197 = arith.constant 256 : index
    %381 = vector.load %arg3[%c0_196, %c256_197] : memref<128x512xbf16, #tpu.memory_space<vmem>>, vector<128x128xbf16>
    %cst_198 = arith.constant dense<0.000000e+00> : vector<16x128xf32>
    %382 = tpu.matmul %341, %381, %cst_198 {dimension_numbers = #tpu.dot_dimension_numbers<[1], [0], [0], [1], [0, 0, 1, 1], [], []>} : vector<16x128xbf16>, vector<128x128xbf16>, vector<16x128xf32> -> vector<16x128xf32>
    %383 = arith.index_cast %c6_i32 : i32 to index
    %c0_199 = arith.constant 0 : index
    %c256_200 = arith.constant 256 : index
    %384 = vector.load %arg2[%383, %c0_199, %c256_200] : memref<8x16x512xbf16, #tpu.memory_space<vmem>>, vector<1x16x128xbf16>
    %385 = vector.shape_cast %384 : vector<1x16x128xbf16> to vector<16x128xbf16>
    %386 = arith.extf %385 : vector<16x128xbf16> to vector<16x128xf32>
    %387 = arith.addf %382, %386 : vector<16x128xf32>
    %cst_201 = arith.constant 5.000000e-01 : f32
    %388 = vector.broadcast %cst_201 : f32 to vector<16x128xf32>
    %389 = arith.mulf %388, %387 : vector<16x128xf32>
    %390 = math.tanh %389 : vector<16x128xf32>
    %cst_202 = arith.constant 5.000000e-01 : f32
    %391 = vector.broadcast %cst_202 : f32 to vector<16x128xf32>
    %392 = arith.mulf %391, %390 : vector<16x128xf32>
    %cst_203 = arith.constant 5.000000e-01 : f32
    %393 = vector.broadcast %cst_203 : f32 to vector<16x128xf32>
    %394 = arith.addf %392, %393 : vector<16x128xf32>
    %395 = math.tanh %380 : vector<16x128xf32>
    %396 = arith.mulf %394, %395 : vector<16x128xf32>
    %c7_i32 = arith.constant 7 : i32
    %397 = arith.truncf %396 : vector<16x128xf32> to vector<16x128xbf16>
    %c0_204 = arith.constant 0 : index
    %c0_205 = arith.constant 0 : index
    %398 = vector.load %arg3[%c0_204, %c0_205] : memref<128x512xbf16, #tpu.memory_space<vmem>>, vector<128x128xbf16>
    %cst_206 = arith.constant dense<0.000000e+00> : vector<16x128xf32>
    %399 = tpu.matmul %397, %398, %cst_206 {dimension_numbers = #tpu.dot_dimension_numbers<[1], [0], [0], [1], [0, 0, 1, 1], [], []>} : vector<16x128xbf16>, vector<128x128xbf16>, vector<16x128xf32> -> vector<16x128xf32>
    %400 = arith.index_cast %c7_i32 : i32 to index
    %c0_207 = arith.constant 0 : index
    %c0_208 = arith.constant 0 : index
    %401 = vector.load %arg2[%400, %c0_207, %c0_208] : memref<8x16x512xbf16, #tpu.memory_space<vmem>>, vector<1x16x128xbf16>
    %402 = vector.shape_cast %401 : vector<1x16x128xbf16> to vector<16x128xbf16>
    %403 = arith.extf %402 : vector<16x128xbf16> to vector<16x128xf32>
    %404 = arith.addf %399, %403 : vector<16x128xf32>
    %cst_209 = arith.constant 5.000000e-01 : f32
    %405 = vector.broadcast %cst_209 : f32 to vector<16x128xf32>
    %406 = arith.mulf %405, %404 : vector<16x128xf32>
    %407 = math.tanh %406 : vector<16x128xf32>
    %cst_210 = arith.constant 5.000000e-01 : f32
    %408 = vector.broadcast %cst_210 : f32 to vector<16x128xf32>
    %409 = arith.mulf %408, %407 : vector<16x128xf32>
    %cst_211 = arith.constant 5.000000e-01 : f32
    %410 = vector.broadcast %cst_211 : f32 to vector<16x128xf32>
    %411 = arith.addf %409, %410 : vector<16x128xf32>
    %c0_212 = arith.constant 0 : index
    %c384_213 = arith.constant 384 : index
    %412 = vector.load %arg3[%c0_212, %c384_213] : memref<128x512xbf16, #tpu.memory_space<vmem>>, vector<128x128xbf16>
    %cst_214 = arith.constant dense<0.000000e+00> : vector<16x128xf32>
    %413 = tpu.matmul %397, %412, %cst_214 {dimension_numbers = #tpu.dot_dimension_numbers<[1], [0], [0], [1], [0, 0, 1, 1], [], []>} : vector<16x128xbf16>, vector<128x128xbf16>, vector<16x128xf32> -> vector<16x128xf32>
    %414 = arith.index_cast %c7_i32 : i32 to index
    %c0_215 = arith.constant 0 : index
    %c384_216 = arith.constant 384 : index
    %415 = vector.load %arg2[%414, %c0_215, %c384_216] : memref<8x16x512xbf16, #tpu.memory_space<vmem>>, vector<1x16x128xbf16>
    %416 = vector.shape_cast %415 : vector<1x16x128xbf16> to vector<16x128xbf16>
    %417 = arith.extf %416 : vector<16x128xbf16> to vector<16x128xf32>
    %418 = arith.addf %413, %417 : vector<16x128xf32>
    %419 = math.tanh %418 : vector<16x128xf32>
    %420 = arith.mulf %411, %419 : vector<16x128xf32>
    %c0_217 = arith.constant 0 : index
    %c128_218 = arith.constant 128 : index
    %421 = vector.load %arg3[%c0_217, %c128_218] : memref<128x512xbf16, #tpu.memory_space<vmem>>, vector<128x128xbf16>
    %cst_219 = arith.constant dense<0.000000e+00> : vector<16x128xf32>
    %422 = tpu.matmul %397, %421, %cst_219 {dimension_numbers = #tpu.dot_dimension_numbers<[1], [0], [0], [1], [0, 0, 1, 1], [], []>} : vector<16x128xbf16>, vector<128x128xbf16>, vector<16x128xf32> -> vector<16x128xf32>
    %423 = arith.index_cast %c7_i32 : i32 to index
    %c0_220 = arith.constant 0 : index
    %c128_221 = arith.constant 128 : index
    %424 = vector.load %arg2[%423, %c0_220, %c128_221] : memref<8x16x512xbf16, #tpu.memory_space<vmem>>, vector<1x16x128xbf16>
    %425 = vector.shape_cast %424 : vector<1x16x128xbf16> to vector<16x128xbf16>
    %426 = arith.extf %425 : vector<16x128xbf16> to vector<16x128xf32>
    %427 = arith.addf %422, %426 : vector<16x128xf32>
    %cst_222 = arith.constant 5.000000e-01 : f32
    %428 = vector.broadcast %cst_222 : f32 to vector<16x128xf32>
    %429 = arith.mulf %428, %427 : vector<16x128xf32>
    %430 = math.tanh %429 : vector<16x128xf32>
    %cst_223 = arith.constant 5.000000e-01 : f32
    %431 = vector.broadcast %cst_223 : f32 to vector<16x128xf32>
    %432 = arith.mulf %431, %430 : vector<16x128xf32>
    %cst_224 = arith.constant 5.000000e-01 : f32
    %433 = vector.broadcast %cst_224 : f32 to vector<16x128xf32>
    %434 = arith.addf %432, %433 : vector<16x128xf32>
    %435 = arith.mulf %434, %380 : vector<16x128xf32>
    %436 = arith.addf %435, %420 : vector<16x128xf32>
    %c0_225 = arith.constant 0 : index
    %c256_226 = arith.constant 256 : index
    %437 = vector.load %arg3[%c0_225, %c256_226] : memref<128x512xbf16, #tpu.memory_space<vmem>>, vector<128x128xbf16>
    %cst_227 = arith.constant dense<0.000000e+00> : vector<16x128xf32>
    %438 = tpu.matmul %397, %437, %cst_227 {dimension_numbers = #tpu.dot_dimension_numbers<[1], [0], [0], [1], [0, 0, 1, 1], [], []>} : vector<16x128xbf16>, vector<128x128xbf16>, vector<16x128xf32> -> vector<16x128xf32>
    %439 = arith.index_cast %c7_i32 : i32 to index
    %c0_228 = arith.constant 0 : index
    %c256_229 = arith.constant 256 : index
    %440 = vector.load %arg2[%439, %c0_228, %c256_229] : memref<8x16x512xbf16, #tpu.memory_space<vmem>>, vector<1x16x128xbf16>
    %441 = vector.shape_cast %440 : vector<1x16x128xbf16> to vector<16x128xbf16>
    %442 = arith.extf %441 : vector<16x128xbf16> to vector<16x128xf32>
    %443 = arith.addf %438, %442 : vector<16x128xf32>
    %cst_230 = arith.constant 5.000000e-01 : f32
    %444 = vector.broadcast %cst_230 : f32 to vector<16x128xf32>
    %445 = arith.mulf %444, %443 : vector<16x128xf32>
    %446 = math.tanh %445 : vector<16x128xf32>
    %cst_231 = arith.constant 5.000000e-01 : f32
    %447 = vector.broadcast %cst_231 : f32 to vector<16x128xf32>
    %448 = arith.mulf %447, %446 : vector<16x128xf32>
    %cst_232 = arith.constant 5.000000e-01 : f32
    %449 = vector.broadcast %cst_232 : f32 to vector<16x128xf32>
    %450 = arith.addf %448, %449 : vector<16x128xf32>
    %451 = math.tanh %436 : vector<16x128xf32>
    %452 = arith.mulf %450, %451 : vector<16x128xf32>
    %c8_i32 = arith.constant 8 : i32
    %c0_233 = arith.constant 0 : index
    %c0_234 = arith.constant 0 : index
    %453 = vector.load %arg5[%c0_233, %c0_234] : memref<16x128xf32, #tpu.memory_space<vmem>>, vector<16x128xf32>
    tpu.vector_store %arg5[%c0_233, %c0_234], %452 {strides = array<i32>} : memref<16x128xf32, #tpu.memory_space<vmem>>, vector<16x128xf32>,
    %c0_235 = arith.constant 0 : index
    %c0_236 = arith.constant 0 : index
    %454 = vector.load %arg6[%c0_235, %c0_236] : memref<16x128xf32, #tpu.memory_space<vmem>>, vector<16x128xf32>
    tpu.vector_store %arg6[%c0_235, %c0_236], %436 {strides = array<i32>} : memref<16x128xf32, #tpu.memory_space<vmem>>, vector<16x128xf32>,
    %c0_i32_237 = arith.constant 0 : i32
    %455 = arith.cmpi eq, %arg1, %c0_i32_237 : i32
    %456 = arith.extui %455 : i1 to i32
    %c0_i32_238 = arith.constant 0 : i32
    %457 = arith.cmpi ne, %456, %c0_i32_238 : i32
    scf.if %457 {
      %c0_239 = arith.constant 0 : index
      %c0_240 = arith.constant 0 : index
      %458 = vector.load %arg4[%c0_239, %c0_240] : memref<16x128xf32, #tpu.memory_space<vmem>>, vector<16x128xf32>
      tpu.vector_store %arg4[%c0_239, %c0_240], %452 {strides = array<i32>} : memref<16x128xf32, #tpu.memory_space<vmem>>, vector<16x128xf32>,
    } else {
    }
    return
  }
  func.func @transform_0(%arg0: i32, %arg1: i32) -> (i32, i32, i32) {
    %c0_i32 = arith.constant 0 : i32
    %c0_i32_0 = arith.constant 0 : i32
    return %arg1, %arg0, %c0_i32 : i32, i32, i32
  }
  func.func @transform_1(%arg0: i32, %arg1: i32) -> (i32, i32) {
    %c0_i32 = arith.constant 0 : i32
    %c0_i32_0 = arith.constant 0 : i32
    %c0_i32_1 = arith.constant 0 : i32
    return %c0_i32, %c0_i32_0 : i32, i32
  }
  func.func @transform_2(%arg0: i32, %arg1: i32) -> (i32, i32) {
    %c0_i32 = arith.constant 0 : i32
    %c0_i32_0 = arith.constant 0 : i32
    return %arg0, %c0_i32 : i32, i32
  }
}

</mosaic_0001>

<llo_original>
// kernel: tpu_custom_call.1
$region0: #{tpu_custom_call.1}
  #allocation0 [shape = 'u32[]', space=smem, size = 0x4, offset = 0x4, fixed_abs, tag = 'smem constant byte address 0x4 - core index']
  #allocation1 [shape = 'u32[144,128]{1,0:T(1,128)}', space=vmem, size = 0x12000, scoped, tag = 'internal scratch']
  #allocation2 [shape = 'f32[16,128]{1,0:T(8,128)}', space=vmem, size = 0x2000, scoped, tag = 'scratch operand']
  #allocation3 [shape = 'f32[16,128]{1,0:T(8,128)}', space=vmem, size = 0x2000, scoped, tag = 'scratch operand']
  %s0 = inlined_call_operand.hbm [shape: bf16[8,16,512], index: 0, kind: input, shape index: {}]
  %s1 = inlined_call_operand.hbm [shape: bf16[128,512], index: 1, kind: input, shape index: {}]
  %s2 = inlined_call_operand.hbm [shape: f32[16,128], index: 2, kind: output, shape index: {}]
  %s3 = sld [smem:[#allocation0]]
  $region34: #{tpu_custom_call.1} parent=0
    _
  %s5 = ssub.s32 1, %s3
  %s6 = scalar_select 0, %s5, %s3
  $region1: #{tpu_custom_call.1} parent=0
    #allocation4 [shape = 'u8[131072]{0}', space=vmem, size = 0x20000, scoped, tag = 'input window, operand 0, single buffered']
    #allocation5 [shape = 's32[1]{0}', space=sflag, size = 0x4, scoped, tag = 'scoped memory for tpu_custom_call.1']
    #allocation6 [shape = 's32[1]{0}', space=sflag, size = 0x4, scoped, tag = 'scoped memory for tpu_custom_call.1']
    #allocation7 [shape = 'u8[131072]{0}', space=vmem, size = 0x20000, scoped, tag = 'input window, operand 1, single buffered']
    #allocation8 [shape = 's32[1]{0}', space=sflag, size = 0x4, scoped, tag = 'scoped memory for tpu_custom_call.1']
    #allocation9 [shape = 'u8[8192]{0}', space=vmem, size = 0x2000, scoped, tag = 'output window, operand 0, single buffered']
    %7 = vsyncpa [#allocation5], 0
    %8 = vsyncpa [#allocation8], 0
    %9 = vsyncpa [#allocation6], 0
    // Predicated region
    $region2: #{tpu_custom_call.1} parent=1 // pred_check
      _
    $region3: #{tpu_custom_call.1} parent=1 // pred_check_branch
      %11 = sbr.rel (0) target = $region5
    $region4: #{tpu_custom_call.1} parent=1 // pred_region
      %s13 = ssub.s32 4096, 4096
      %14 = vsyncadd [#allocation5], %s13
      %s15 = sshll.u32 [#allocation4], 4
      %s16 = int_to_ptr.vmem [resolvable:$true] %s15
      %21 = dma.hbm_to_vmem [thread:$0]  %s0, 4096, %s16, [#allocation5], 256, 256, 16
    $region5: #{tpu_custom_call.1} parent=1 // pred_fallthru
      _
    // Predicated region
    $region6: #{tpu_custom_call.1} parent=1 // pred_check
      _
    $region7: #{tpu_custom_call.1} parent=1 // pred_check_branch
      %23 = sbr.rel (0) target = $region9
    $region8: #{tpu_custom_call.1} parent=1 // pred_region
      %s25 = ssub.s32 4096, 4096
      %26 = vsyncadd [#allocation8], %s25
      %s27 = sshll.u32 [#allocation7], 4
      %s28 = int_to_ptr.vmem [resolvable:$true] %s27
      %33 = dma.hbm_to_vmem [thread:$0]  %s1, 4096, %s28, [#allocation8], 256, 256, 16
    $region9: #{tpu_custom_call.1} parent=1 // pred_fallthru
      _
    // Predicated region
    $region10: #{tpu_custom_call.1} parent=1 // pred_check
      _
    $region11: #{tpu_custom_call.1} parent=1 // pred_check_branch
      %35 = sbr.rel (0) target = $region13
    $region12: #{tpu_custom_call.1} parent=1 // pred_region
      %36 = dma.done [#allocation5], 4096
    $region13: #{tpu_custom_call.1} parent=1 // pred_fallthru
      _
    // Predicated region
    $region14: #{tpu_custom_call.1} parent=1 // pred_check
      _
    $region15: #{tpu_custom_call.1} parent=1 // pred_check_branch
      %38 = sbr.rel (0) target = $region17
    $region16: #{tpu_custom_call.1} parent=1 // pred_region
      %39 = dma.done [#allocation8], 4096
    $region17: #{tpu_custom_call.1} parent=1 // pred_fallthru
      _
    %p41 = scmp.eq.s32.totalorder 0, 0
    // Predicated region
    $region18: #{tpu_custom_call.1} parent=1 // pred_check
      %p42 = pneg %p41
    $region19: #{tpu_custom_call.1} parent=1 // pred_check_branch
      %44 = sbr.rel (%p42) target = $region21
    $region20: #{tpu_custom_call.1} parent=1 // pred_region
      %45 = vst [vmem:[#allocation2] sm:$0xff] 0.0
      %46 = vst [vmem:[#allocation2 + $0x8] sm:$0xff] 0.0
      %47 = vst [vmem:[#allocation3] sm:$0xff] 0.0
      %48 = vst [vmem:[#allocation3 + $0x8] sm:$0xff] 0.0
    $region21: #{tpu_custom_call.1} parent=1 // pred_fallthru
      _
    %v49 = vld [vmem:[#allocation2] sm:$0xff]
    %v50 = vld [vmem:[#allocation2 + $0x8] sm:$0xff]
    %v51 = vld [vmem:[#allocation3] sm:$0xff]
    %v52 = vld [vmem:[#allocation3 + $0x8] sm:$0xff]
    %v53 = vpack.c.bf16 %v50, %v49
    %v54 = vld [vmem:[#allocation7] sm:$0xf]
    %v55 = vld [vmem:[#allocation7 + $0x10] sm:$0xf]
    %v56 = vld [vmem:[#allocation7 + $0x20] sm:$0xf]
    %v57 = vld [vmem:[#allocation7 + $0x30] sm:$0xf]
    %v58 = vld [vmem:[#allocation7 + $0x40] sm:$0xf]
    %v59 = vld [vmem:[#allocation7 + $0x50] sm:$0xf]
    %v60 = vld [vmem:[#allocation7 + $0x60] sm:$0xf]
    %v61 = vld [vmem:[#allocation7 + $0x70] sm:$0xf]
    %v62 = vld [vmem:[#allocation7 + $0x80] sm:$0xf]
    %v63 = vld [vmem:[#allocation7 + $0x90] sm:$0xf]
    %v64 = vld [vmem:[#allocation7 + $0xa0] sm:$0xf]
    %v65 = vld [vmem:[#allocation7 + $0xb0] sm:$0xf]
    %v66 = vld [vmem:[#allocation7 + $0xc0] sm:$0xf]
    %v67 = vld [vmem:[#allocation7 + $0xd0] sm:$0xf]
    %v68 = vld [vmem:[#allocation7 + $0xe0] sm:$0xf]
    %v69 = vld [vmem:[#allocation7 + $0xf0] sm:$0xf]
    %v70 = vld [vmem:[#allocation4] sm:$0xf]
    %v71 = vld [vmem:[#allocation4 + $0x10] sm:$0xf]
    %v72 = vunpack.c.l.bf16 %v70
    %v73 = vunpack.c.l.bf16 %v71
    %v90 = vunpack.c.l.b16 %v54
    %v91 = vunpack.c.l.b16 %v55
    %v92 = vunpack.c.l.b16 %v56
    %v93 = vunpack.c.l.b16 %v57
    %v94 = vunpack.c.l.b16 %v58
    %v95 = vunpack.c.l.b16 %v59
    %v96 = vunpack.c.l.b16 %v60
    %v97 = vunpack.c.l.b16 %v61
    %v98 = vunpack.c.l.b16 %v62
    %v99 = vunpack.c.l.b16 %v63
    %v100 = vunpack.c.l.b16 %v64
    %v101 = vunpack.c.l.b16 %v65
    %v102 = vunpack.c.l.b16 %v66
    %v103 = vunpack.c.l.b16 %v67
    %v104 = vunpack.c.l.b16 %v68
    %v105 = vunpack.c.l.b16 %v69
    %v106 = vpack.c.b16 %v91, %v90
    %v107 = vpack.c.b16 %v93, %v92
    %v108 = vpack.c.b16 %v95, %v94
    %v109 = vpack.c.b16 %v97, %v96
    %v110 = vpack.c.b16 %v99, %v98
    %v111 = vpack.c.b16 %v101, %v100
    %v112 = vpack.c.b16 %v103, %v102
    %v113 = vpack.c.b16 %v105, %v104
    %122 = vmatprep.subr.bf16.mxu0 0
    %123 = vmatpush1.bf16.msra.mxu0 %v113
    %124 = vmatprep.subr.bf16.mxu0 0
    %125 = vmatpush1.bf16.msra.mxu0 %v112
    %126 = vmatprep.subr.bf16.mxu0 0
    %127 = vmatpush1.bf16.msra.mxu0 %v111
    %128 = vmatprep.subr.bf16.mxu0 0
    %129 = vmatpush1.bf16.msra.mxu0 %v110
    %130 = vmatprep.subr.bf16.mxu0 0
    %131 = vmatpush1.bf16.msra.mxu0 %v109
    %132 = vmatprep.subr.bf16.mxu0 0
    %133 = vmatpush1.bf16.msra.mxu0 %v108
    %134 = vmatprep.subr.bf16.mxu0 0
    %135 = vmatpush1.bf16.msra.mxu0 %v107
    %136 = vmatprep.subr.bf16.mxu0 0
    %137 = vmatpush1.bf16.msra.mxu0 %v106
    %138 = vmatprep.subr.bf16.mxu0 0
    %139 = vmatpush2.bf16.msra.mxu0 0
    %140 = vmatprep.subr.bf16.mxu0 0
    %141 = vmatpush2.bf16.msra.mxu0 0
    %142 = vmatprep.subr.bf16.mxu0 0
    %143 = vmatpush2.bf16.msra.mxu0 0
    %144 = vmatprep.subr.bf16.mxu0 0
    %145 = vmatpush2.bf16.msra.mxu0 0
    %146 = vmatprep.subr.bf16.mxu0 0
    %147 = vmatpush2.bf16.msra.mxu0 0
    %148 = vmatprep.subr.bf16.mxu0 0
    %149 = vmatpush2.bf16.msra.mxu0 0
    %150 = vmatprep.subr.bf16.mxu0 0
    %151 = vmatpush2.bf16.msra.mxu0 0
    %152 = vmatprep.subr.bf16.mxu0 0
    %153 = vmatpush2.bf16.msra.mxu0 0
    %154 = vmatprep.mubr.bf16.mxu0 0
    %155 = vmatmul.mubr.bf16.gmra.mxu0 %v53
    %v156 = vpop.f32.mrf.mxu0
    %v157 = vadd.f32 %v72, %v156
    %v158 = vpop.f32.mrf.mxu0
    %v159 = vpop.f32.mrf.mxu0
    %v160 = vadd.f32 %v73, %v159
    %v161 = vpop.f32.mrf.mxu0
    %162 = vdwg.mxu0
    %v163 = vmul.f32 %v157, 0.5
    %v164 = vmul.f32 %v160, 0.5
    %v165 = vtanh.pop %v163
    %v166 = vtanh.pop %v164
    %v167 = vmul.f32 %v165, 0.5
    %v168 = vmul.f32 %v166, 0.5
    %v169 = vadd.f32 %v167, 0.5
    %v170 = vadd.f32 %v168, 0.5
    %v171 = vld [vmem:[#allocation7 + $0xc] sm:$0xf]
    %v172 = vld [vmem:[#allocation7 + $0x1c] sm:$0xf]
    %v173 = vld [vmem:[#allocation7 + $0x2c] sm:$0xf]
    %v174 = vld [vmem:[#allocation7 + $0x3c] sm:$0xf]
    %v175 = vld [vmem:[#allocation7 + $0x4c] sm:$0xf]
    %v176 = vld [vmem:[#allocation7 + $0x5c] sm:$0xf]
    %v177 = vld [vmem:[#allocation7 + $0x6c] sm:$0xf]
    %v178 = vld [vmem:[#allocation7 + $0x7c] sm:$0xf]
    %v179 = vld [vmem:[#allocation7 + $0x8c] sm:$0xf]
    %v180 = vld [vmem:[#allocation7 + $0x9c] sm:$0xf]
    %v181 = vld [vmem:[#allocation7 + $0xac] sm:$0xf]
    %v182 = vld [vmem:[#allocation7 + $0xbc] sm:$0xf]
    %v183 = vld [vmem:[#allocation7 + $0xcc] sm:$0xf]
    %v184 = vld [vmem:[#allocation7 + $0xdc] sm:$0xf]
    %v185 = vld [vmem:[#allocation7 + $0xec] sm:$0xf]
    %v186 = vld [vmem:[#allocation7 + $0xfc] sm:$0xf]
    %v187 = vld [vmem:[#allocation4 + $0xc] sm:$0xf]
    %v188 = vld [vmem:[#allocation4 + $0x1c] sm:$0xf]
    %v189 = vunpack.c.l.bf16 %v187
    %v190 = vunpack.c.l.bf16 %v188
    %v207 = vunpack.c.l.b16 %v171
    %v208 = vunpack.c.l.b16 %v172
    %v209 = vunpack.c.l.b16 %v173
    %v210 = vunpack.c.l.b16 %v174
    %v211 = vunpack.c.l.b16 %v175
    %v212 = vunpack.c.l.b16 %v176
    %v213 = vunpack.c.l.b16 %v177
    %v214 = vunpack.c.l.b16 %v178
    %v215 = vunpack.c.l.b16 %v179
    %v216 = vunpack.c.l.b16 %v180
    %v217 = vunpack.c.l.b16 %v181
    %v218 = vunpack.c.l.b16 %v182
    %v219 = vunpack.c.l.b16 %v183
    %v220 = vunpack.c.l.b16 %v184
    %v221 = vunpack.c.l.b16 %v185
    %v222 = vunpack.c.l.b16 %v186
    %v223 = vpack.c.b16 %v208, %v207
    %v224 = vpack.c.b16 %v210, %v209
    %v225 = vpack.c.b16 %v212, %v211
    %v226 = vpack.c.b16 %v214, %v213
    %v227 = vpack.c.b16 %v216, %v215
    %v228 = vpack.c.b16 %v218, %v217
    %v229 = vpack.c.b16 %v220, %v219
    %v230 = vpack.c.b16 %v222, %v221
    %239 = vmatprep.subr.bf16.mxu0 0
    %240 = vmatpush1.bf16.msra.mxu0 %v230
    %241 = vmatprep.subr.bf16.mxu0 0
    %242 = vmatpush1.bf16.msra.mxu0 %v229
    %243 = vmatprep.subr.bf16.mxu0 0
    %244 = vmatpush1.bf16.msra.mxu0 %v228
    %245 = vmatprep.subr.bf16.mxu0 0
    %246 = vmatpush1.bf16.msra.mxu0 %v227
    %247 = vmatprep.subr.bf16.mxu0 0
    %248 = vmatpush1.bf16.msra.mxu0 %v226
    %249 = vmatprep.subr.bf16.mxu0 0
    %250 = vmatpush1.bf16.msra.mxu0 %v225
    %251 = vmatprep.subr.bf16.mxu0 0
    %252 = vmatpush1.bf16.msra.mxu0 %v224
    %253 = vmatprep.subr.bf16.mxu0 0
    %254 = vmatpush1.bf16.msra.mxu0 %v223
    %255 = vmatprep.subr.bf16.mxu0 0
    %256 = vmatpush2.bf16.msra.mxu0 0
    %257 = vmatprep.subr.bf16.mxu0 0
    %258 = vmatpush2.bf16.msra.mxu0 0
    %259 = vmatprep.subr.bf16.mxu0 0
    %260 = vmatpush2.bf16.msra.mxu0 0
    %261 = vmatprep.subr.bf16.mxu0 0
    %262 = vmatpush2.bf16.msra.mxu0 0
    %263 = vmatprep.subr.bf16.mxu0 0
    %264 = vmatpush2.bf16.msra.mxu0 0
    %265 = vmatprep.subr.bf16.mxu0 0
    %266 = vmatpush2.bf16.msra.mxu0 0
    %267 = vmatprep.subr.bf16.mxu0 0
    %268 = vmatpush2.bf16.msra.mxu0 0
    %269 = vmatprep.subr.bf16.mxu0 0
    %270 = vmatpush2.bf16.msra.mxu0 0
    %271 = vmatprep.mubr.bf16.mxu0 0
    %272 = vmatmul.mubr.bf16.gmra.mxu0 %v53
    %v273 = vpop.f32.mrf.mxu0
    %v274 = vadd.f32 %v189, %v273
    %v275 = vpop.f32.mrf.mxu0
    %v276 = vpop.f32.mrf.mxu0
    %v277 = vadd.f32 %v190, %v276
    %v278 = vpop.f32.mrf.mxu0
    %279 = vdwg.mxu0
    %v280 = vtanh.pop %v274
    %v281 = vtanh.pop %v277
    %v282 = vmul.f32 %v169, %v280
    %v283 = vmul.f32 %v170, %v281
    %v284 = vld [vmem:[#allocation7 + $0x4] sm:$0xf]
    %v285 = vld [vmem:[#allocation7 + $0x14] sm:$0xf]
    %v286 = vld [vmem:[#allocation7 + $0x24] sm:$0xf]
    %v287 = vld [vmem:[#allocation7 + $0x34] sm:$0xf]
    %v288 = vld [vmem:[#allocation7 + $0x44] sm:$0xf]
    %v289 = vld [vmem:[#allocation7 + $0x54] sm:$0xf]
    %v290 = vld [vmem:[#allocation7 + $0x64] sm:$0xf]
    %v291 = vld [vmem:[#allocation7 + $0x74] sm:$0xf]
    %v292 = vld [vmem:[#allocation7 + $0x84] sm:$0xf]
    %v293 = vld [vmem:[#allocation7 + $0x94] sm:$0xf]
    %v294 = vld [vmem:[#allocation7 + $0xa4] sm:$0xf]
    %v295 = vld [vmem:[#allocation7 + $0xb4] sm:$0xf]
    %v296 = vld [vmem:[#allocation7 + $0xc4] sm:$0xf]
    %v297 = vld [vmem:[#allocation7 + $0xd4] sm:$0xf]
    %v298 = vld [vmem:[#allocation7 + $0xe4] sm:$0xf]
    %v299 = vld [vmem:[#allocation7 + $0xf4] sm:$0xf]
    %v300 = vld [vmem:[#allocation4 + $0x4] sm:$0xf]
    %v301 = vld [vmem:[#allocation4 + $0x14] sm:$0xf]
    %v302 = vunpack.c.l.bf16 %v300
    %v303 = vunpack.c.l.bf16 %v301
    %v320 = vunpack.c.l.b16 %v284
    %v321 = vunpack.c.l.b16 %v285
    %v322 = vunpack.c.l.b16 %v286
    %v323 = vunpack.c.l.b16 %v287
    %v324 = vunpack.c.l.b16 %v288
    %v325 = vunpack.c.l.b16 %v289
    %v326 = vunpack.c.l.b16 %v290
    %v327 = vunpack.c.l.b16 %v291
    %v328 = vunpack.c.l.b16 %v292
    %v329 = vunpack.c.l.b16 %v293
    %v330 = vunpack.c.l.b16 %v294
    %v331 = vunpack.c.l.b16 %v295
    %v332 = vunpack.c.l.b16 %v296
    %v333 = vunpack.c.l.b16 %v297
    %v334 = vunpack.c.l.b16 %v298
    %v335 = vunpack.c.l.b16 %v299
    %v336 = vpack.c.b16 %v321, %v320
    %v337 = vpack.c.b16 %v323, %v322
    %v338 = vpack.c.b16 %v325, %v324
    %v339 = vpack.c.b16 %v327, %v326
    %v340 = vpack.c.b16 %v329, %v328
    %v341 = vpack.c.b16 %v331, %v330
    %v342 = vpack.c.b16 %v333, %v332
    %v343 = vpack.c.b16 %v335, %v334
    %352 = vmatprep.subr.bf16.mxu0 0
    %353 = vmatpush1.bf16.msra.mxu0 %v343
    %354 = vmatprep.subr.bf16.mxu0 0
    %355 = vmatpush1.bf16.msra.mxu0 %v342
    %356 = vmatprep.subr.bf16.mxu0 0
    %357 = vmatpush1.bf16.msra.mxu0 %v341
    %358 = vmatprep.subr.bf16.mxu0 0
    %359 = vmatpush1.bf16.msra.mxu0 %v340
    %360 = vmatprep.subr.bf16.mxu0 0
    %361 = vmatpush1.bf16.msra.mxu0 %v339
    %362 = vmatprep.subr.bf16.mxu0 0
    %363 = vmatpush1.bf16.msra.mxu0 %v338
    %364 = vmatprep.subr.bf16.mxu0 0
    %365 = vmatpush1.bf16.msra.mxu0 %v337
    %366 = vmatprep.subr.bf16.mxu0 0
    %367 = vmatpush1.bf16.msra.mxu0 %v336
    %368 = vmatprep.subr.bf16.mxu0 0
    %369 = vmatpush2.bf16.msra.mxu0 0
    %370 = vmatprep.subr.bf16.mxu0 0
    %371 = vmatpush2.bf16.msra.mxu0 0
    %372 = vmatprep.subr.bf16.mxu0 0
    %373 = vmatpush2.bf16.msra.mxu0 0
    %374 = vmatprep.subr.bf16.mxu0 0
    %375 = vmatpush2.bf16.msra.mxu0 0
    %376 = vmatprep.subr.bf16.mxu0 0
    %377 = vmatpush2.bf16.msra.mxu0 0
    %378 = vmatprep.subr.bf16.mxu0 0
    %379 = vmatpush2.bf16.msra.mxu0 0
    %380 = vmatprep.subr.bf16.mxu0 0
    %381 = vmatpush2.bf16.msra.mxu0 0
    %382 = vmatprep.subr.bf16.mxu0 0
    %383 = vmatpush2.bf16.msra.mxu0 0
    %384 = vmatprep.mubr.bf16.mxu0 0
    %385 = vmatmul.mubr.bf16.gmra.mxu0 %v53
    %v386 = vpop.f32.mrf.mxu0
    %v387 = vadd.f32 %v302, %v386
    %v388 = vpop.f32.mrf.mxu0
    %v389 = vpop.f32.mrf.mxu0
    %v390 = vadd.f32 %v303, %v389
    %v391 = vpop.f32.mrf.mxu0
    %392 = vdwg.mxu0
    %v393 = vmul.f32 %v387, 0.5
    %v394 = vmul.f32 %v390, 0.5
    %v395 = vtanh.pop %v393
    %v396 = vtanh.pop %v394
    %v397 = vmul.f32 %v395, 0.5
    %v398 = vmul.f32 %v396, 0.5
    %v399 = vadd.f32 %v397, 0.5
    %v400 = vadd.f32 %v398, 0.5
    %v401 = vmul.f32 %v399, %v51
    %v402 = vmul.f32 %v400, %v52
    %v403 = vadd.f32 %v401, %v282
    %v404 = vadd.f32 %v402, %v283
    %v405 = vld [vmem:[#allocation7 + $0x8] sm:$0xf]
    %v406 = vld [vmem:[#allocation7 + $0x18] sm:$0xf]
    %v407 = vld [vmem:[#allocation7 + $0x28] sm:$0xf]
    %v408 = vld [vmem:[#allocation7 + $0x38] sm:$0xf]
    %v409 = vld [vmem:[#allocation7 + $0x48] sm:$0xf]
    %v410 = vld [vmem:[#allocation7 + $0x58] sm:$0xf]
    %v411 = vld [vmem:[#allocation7 + $0x68] sm:$0xf]
    %v412 = vld [vmem:[#allocation7 + $0x78] sm:$0xf]
    %v413 = vld [vmem:[#allocation7 + $0x88] sm:$0xf]
    %v414 = vld [vmem:[#allocation7 + $0x98] sm:$0xf]
    %v415 = vld [vmem:[#allocation7 + $0xa8] sm:$0xf]
    %v416 = vld [vmem:[#allocation7 + $0xb8] sm:$0xf]
    %v417 = vld [vmem:[#allocation7 + $0xc8] sm:$0xf]
    %v418 = vld [vmem:[#allocation7 + $0xd8] sm:$0xf]
    %v419 = vld [vmem:[#allocation7 + $0xe8] sm:$0xf]
    %v420 = vld [vmem:[#allocation7 + $0xf8] sm:$0xf]
    %v421 = vld [vmem:[#allocation4 + $0x8] sm:$0xf]
    %v422 = vld [vmem:[#allocation4 + $0x18] sm:$0xf]
    %v423 = vunpack.c.l.bf16 %v421
    %v424 = vunpack.c.l.bf16 %v422
    %v441 = vunpack.c.l.b16 %v405
    %v442 = vunpack.c.l.b16 %v406
    %v443 = vunpack.c.l.b16 %v407
    %v444 = vunpack.c.l.b16 %v408
    %v445 = vunpack.c.l.b16 %v409
    %v446 = vunpack.c.l.b16 %v410
    %v447 = vunpack.c.l.b16 %v411
    %v448 = vunpack.c.l.b16 %v412
    %v449 = vunpack.c.l.b16 %v413
    %v450 = vunpack.c.l.b16 %v414
    %v451 = vunpack.c.l.b16 %v415
    %v452 = vunpack.c.l.b16 %v416
    %v453 = vunpack.c.l.b16 %v417
    %v454 = vunpack.c.l.b16 %v418
    %v455 = vunpack.c.l.b16 %v419
    %v456 = vunpack.c.l.b16 %v420
    %v457 = vpack.c.b16 %v442, %v441
    %v458 = vpack.c.b16 %v444, %v443
    %v459 = vpack.c.b16 %v446, %v445
    %v460 = vpack.c.b16 %v448, %v447
    %v461 = vpack.c.b16 %v450, %v449
    %v462 = vpack.c.b16 %v452, %v451
    %v463 = vpack.c.b16 %v454, %v453
    %v464 = vpack.c.b16 %v456, %v455
    %473 = vmatprep.subr.bf16.mxu0 0
    %474 = vmatpush1.bf16.msra.mxu0 %v464
    %475 = vmatprep.subr.bf16.mxu0 0
    %476 = vmatpush1.bf16.msra.mxu0 %v463
    %477 = vmatprep.subr.bf16.mxu0 0
    %478 = vmatpush1.bf16.msra.mxu0 %v462
    %479 = vmatprep.subr.bf16.mxu0 0
    %480 = vmatpush1.bf16.msra.mxu0 %v461
    %481 = vmatprep.subr.bf16.mxu0 0
    %482 = vmatpush1.bf16.msra.mxu0 %v460
    %483 = vmatprep.subr.bf16.mxu0 0
    %484 = vmatpush1.bf16.msra.mxu0 %v459
    %485 = vmatprep.subr.bf16.mxu0 0
    %486 = vmatpush1.bf16.msra.mxu0 %v458
    %487 = vmatprep.subr.bf16.mxu0 0
    %488 = vmatpush1.bf16.msra.mxu0 %v457
    %489 = vmatprep.subr.bf16.mxu0 0
    %490 = vmatpush2.bf16.msra.mxu0 0
    %491 = vmatprep.subr.bf16.mxu0 0
    %492 = vmatpush2.bf16.msra.mxu0 0
    %493 = vmatprep.subr.bf16.mxu0 0
    %494 = vmatpush2.bf16.msra.mxu0 0
    %495 = vmatprep.subr.bf16.mxu0 0
    %496 = vmatpush2.bf16.msra.mxu0 0
    %497 = vmatprep.subr.bf16.mxu0 0
    %498 = vmatpush2.bf16.msra.mxu0 0
    %499 = vmatprep.subr.bf16.mxu0 0
    %500 = vmatpush2.bf16.msra.mxu0 0
    %501 = vmatprep.subr.bf16.mxu0 0
    %502 = vmatpush2.bf16.msra.mxu0 0
    %503 = vmatprep.subr.bf16.mxu0 0
    %504 = vmatpush2.bf16.msra.mxu0 0
    %505 = vmatprep.mubr.bf16.mxu0 0
    %506 = vmatmul.mubr.bf16.gmra.mxu0 %v53
    %v507 = vpop.f32.mrf.mxu0
    %v508 = vadd.f32 %v423, %v507
    %v509 = vpop.f32.mrf.mxu0
    %v510 = vpop.f32.mrf.mxu0
    %v511 = vadd.f32 %v424, %v510
    %v512 = vpop.f32.mrf.mxu0
    %513 = vdwg.mxu0
    %v514 = vmul.f32 %v508, 0.5
    %v515 = vmul.f32 %v511, 0.5
    %v516 = vtanh.pop %v514
    %v517 = vtanh.pop %v515
    %v518 = vmul.f32 %v516, 0.5
    %v519 = vmul.f32 %v517, 0.5
    %v520 = vadd.f32 %v518, 0.5
    %v521 = vadd.f32 %v519, 0.5
    %v522 = vtanh.pop %v403
    %v523 = vtanh.pop %v404
    %v524 = vmul.f32 %v520, %v522
    %v525 = vmul.f32 %v521, %v523
    %v526 = vpack.c.bf16 %v525, %v524
    %s527 = scalar_lea.vmem [#allocation4], 32
    %v528 = vld [vmem:[%s527] sm:$0xf]
    %v529 = vld [vmem:[%s527 + $0x10] sm:$0xf]
    %v530 = vunpack.c.l.bf16 %v528
    %v531 = vunpack.c.l.bf16 %v529
    %532 = vmatprep.subr.bf16.mxu0 0
    %533 = vmatpush1.bf16.msra.mxu0 %v113
    %534 = vmatprep.subr.bf16.mxu0 0
    %535 = vmatpush1.bf16.msra.mxu0 %v112
    %536 = vmatprep.subr.bf16.mxu0 0
    %537 = vmatpush1.bf16.msra.mxu0 %v111
    %538 = vmatprep.subr.bf16.mxu0 0
    %539 = vmatpush1.bf16.msra.mxu0 %v110
    %540 = vmatprep.subr.bf16.mxu0 0
    %541 = vmatpush1.bf16.msra.mxu0 %v109
    %542 = vmatprep.subr.bf16.mxu0 0
    %543 = vmatpush1.bf16.msra.mxu0 %v108
    %544 = vmatprep.subr.bf16.mxu0 0
    %545 = vmatpush1.bf16.msra.mxu0 %v107
    %546 = vmatprep.subr.bf16.mxu0 0
    %547 = vmatpush1.bf16.msra.mxu0 %v106
    %548 = vmatprep.subr.bf16.mxu0 0
    %549 = vmatpush2.bf16.msra.mxu0 0
    %550 = vmatprep.subr.bf16.mxu0 0
    %551 = vmatpush2.bf16.msra.mxu0 0
    %552 = vmatprep.subr.bf16.mxu0 0
    %553 = vmatpush2.bf16.msra.mxu0 0
    %554 = vmatprep.subr.bf16.mxu0 0
    %555 = vmatpush2.bf16.msra.mxu0 0
    %556 = vmatprep.subr.bf16.mxu0 0
    %557 = vmatpush2.bf16.msra.mxu0 0
    %558 = vmatprep.subr.bf16.mxu0 0
    %559 = vmatpush2.bf16.msra.mxu0 0
    %560 = vmatprep.subr.bf16.mxu0 0
    %561 = vmatpush2.bf16.msra.mxu0 0
    %562 = vmatprep.subr.bf16.mxu0 0
    %563 = vmatpush2.bf16.msra.mxu0 0
    %564 = vmatprep.mubr.bf16.mxu0 0
    %565 = vmatmul.mubr.bf16.gmra.mxu0 %v526
    %v566 = vpop.f32.mrf.mxu0
    %v567 = vadd.f32 %v530, %v566
    %v568 = vpop.f32.mrf.mxu0
    %v569 = vpop.f32.mrf.mxu0
    %v570 = vadd.f32 %v531, %v569
    %v571 = vpop.f32.mrf.mxu0
    %572 = vdwg.mxu0
    %v573 = vmul.f32 %v567, 0.5
    %v574 = vmul.f32 %v570, 0.5
    %v575 = vtanh.pop %v573
    %v576 = vtanh.pop %v574
    %v577 = vmul.f32 %v575, 0.5
    %v578 = vmul.f32 %v576, 0.5
    %v579 = vadd.f32 %v577, 0.5
    %v580 = vadd.f32 %v578, 0.5
    %v581 = vld [vmem:[%s527 + $0xc] sm:$0xf]
    %v582 = vld [vmem:[%s527 + $0x1c] sm:$0xf]
    %v583 = vunpack.c.l.bf16 %v581
    %v584 = vunpack.c.l.bf16 %v582
    %585 = vmatprep.subr.bf16.mxu0 0
    %586 = vmatpush1.bf16.msra.mxu0 %v230
    %587 = vmatprep.subr.bf16.mxu0 0
    %588 = vmatpush1.bf16.msra.mxu0 %v229
    %589 = vmatprep.subr.bf16.mxu0 0
    %590 = vmatpush1.bf16.msra.mxu0 %v228
    %591 = vmatprep.subr.bf16.mxu0 0
    %592 = vmatpush1.bf16.msra.mxu0 %v227
    %593 = vmatprep.subr.bf16.mxu0 0
    %594 = vmatpush1.bf16.msra.mxu0 %v226
    %595 = vmatprep.subr.bf16.mxu0 0
    %596 = vmatpush1.bf16.msra.mxu0 %v225
    %597 = vmatprep.subr.bf16.mxu0 0
    %598 = vmatpush1.bf16.msra.mxu0 %v224
    %599 = vmatprep.subr.bf16.mxu0 0
    %600 = vmatpush1.bf16.msra.mxu0 %v223
    %601 = vmatprep.subr.bf16.mxu0 0
    %602 = vmatpush2.bf16.msra.mxu0 0
    %603 = vmatprep.subr.bf16.mxu0 0
    %604 = vmatpush2.bf16.msra.mxu0 0
    %605 = vmatprep.subr.bf16.mxu0 0
    %606 = vmatpush2.bf16.msra.mxu0 0
    %607 = vmatprep.subr.bf16.mxu0 0
    %608 = vmatpush2.bf16.msra.mxu0 0
    %609 = vmatprep.subr.bf16.mxu0 0
    %610 = vmatpush2.bf16.msra.mxu0 0
    %611 = vmatprep.subr.bf16.mxu0 0
    %612 = vmatpush2.bf16.msra.mxu0 0
    %613 = vmatprep.subr.bf16.mxu0 0
    %614 = vmatpush2.bf16.msra.mxu0 0
    %615 = vmatprep.subr.bf16.mxu0 0
    %616 = vmatpush2.bf16.msra.mxu0 0
    %617 = vmatprep.mubr.bf16.mxu0 0
    %618 = vmatmul.mubr.bf16.gmra.mxu0 %v526
    %v619 = vpop.f32.mrf.mxu0
    %v620 = vadd.f32 %v583, %v619
    %v621 = vpop.f32.mrf.mxu0
    %v622 = vpop.f32.mrf.mxu0
    %v623 = vadd.f32 %v584, %v622
    %v624 = vpop.f32.mrf.mxu0
    %625 = vdwg.mxu0
    %v626 = vtanh.pop %v620
    %v627 = vtanh.pop %v623
    %v628 = vmul.f32 %v579, %v626
    %v629 = vmul.f32 %v580, %v627
    %v630 = vld [vmem:[%s527 + $0x4] sm:$0xf]
    %v631 = vld [vmem:[%s527 + $0x14] sm:$0xf]
    %v632 = vunpack.c.l.bf16 %v630
    %v633 = vunpack.c.l.bf16 %v631
    %634 = vmatprep.subr.bf16.mxu0 0
    %635 = vmatpush1.bf16.msra.mxu0 %v343
    %636 = vmatprep.subr.bf16.mxu0 0
    %637 = vmatpush1.bf16.msra.mxu0 %v342
    %638 = vmatprep.subr.bf16.mxu0 0
    %639 = vmatpush1.bf16.msra.mxu0 %v341
    %640 = vmatprep.subr.bf16.mxu0 0
    %641 = vmatpush1.bf16.msra.mxu0 %v340
    %642 = vmatprep.subr.bf16.mxu0 0
    %643 = vmatpush1.bf16.msra.mxu0 %v339
    %644 = vmatprep.subr.bf16.mxu0 0
    %645 = vmatpush1.bf16.msra.mxu0 %v338
    %646 = vmatprep.subr.bf16.mxu0 0
    %647 = vmatpush1.bf16.msra.mxu0 %v337
    %648 = vmatprep.subr.bf16.mxu0 0
    %649 = vmatpush1.bf16.msra.mxu0 %v336
    %650 = vmatprep.subr.bf16.mxu0 0
    %651 = vmatpush2.bf16.msra.mxu0 0
    %652 = vmatprep.subr.bf16.mxu0 0
    %653 = vmatpush2.bf16.msra.mxu0 0
    %654 = vmatprep.subr.bf16.mxu0 0
    %655 = vmatpush2.bf16.msra.mxu0 0
    %656 = vmatprep.subr.bf16.mxu0 0
    %657 = vmatpush2.bf16.msra.mxu0 0
    %658 = vmatprep.subr.bf16.mxu0 0
    %659 = vmatpush2.bf16.msra.mxu0 0
    %660 = vmatprep.subr.bf16.mxu0 0
    %661 = vmatpush2.bf16.msra.mxu0 0
    %662 = vmatprep.subr.bf16.mxu0 0
    %663 = vmatpush2.bf16.msra.mxu0 0
    %664 = vmatprep.subr.bf16.mxu0 0
    %665 = vmatpush2.bf16.msra.mxu0 0
    %666 = vmatprep.mubr.bf16.mxu0 0
    %667 = vmatmul.mubr.bf16.gmra.mxu0 %v526
    %v668 = vpop.f32.mrf.mxu0
    %v669 = vadd.f32 %v632, %v668
    %v670 = vpop.f32.mrf.mxu0
    %v671 = vpop.f32.mrf.mxu0
    %v672 = vadd.f32 %v633, %v671
    %v673 = vpop.f32.mrf.mxu0
    %674 = vdwg.mxu0
    %v675 = vmul.f32 %v669, 0.5
    %v676 = vmul.f32 %v672, 0.5
    %v677 = vtanh.pop %v675
    %v678 = vtanh.pop %v676
    %v679 = vmul.f32 %v677, 0.5
    %v680 = vmul.f32 %v678, 0.5
    %v681 = vadd.f32 %v679, 0.5
    %v682 = vadd.f32 %v680, 0.5
    %v683 = vmul.f32 %v681, %v403
    %v684 = vmul.f32 %v682, %v404
    %v685 = vadd.f32 %v683, %v628
    %v686 = vadd.f32 %v684, %v629
    %v687 = vld [vmem:[%s527 + $0x8] sm:$0xf]
    %v688 = vld [vmem:[%s527 + $0x18] sm:$0xf]
    %v689 = vunpack.c.l.bf16 %v687
    %v690 = vunpack.c.l.bf16 %v688
    %691 = vmatprep.subr.bf16.mxu0 0
    %692 = vmatpush1.bf16.msra.mxu0 %v464
    %693 = vmatprep.subr.bf16.mxu0 0
    %694 = vmatpush1.bf16.msra.mxu0 %v463
    %695 = vmatprep.subr.bf16.mxu0 0
    %696 = vmatpush1.bf16.msra.mxu0 %v462
    %697 = vmatprep.subr.bf16.mxu0 0
    %698 = vmatpush1.bf16.msra.mxu0 %v461
    %699 = vmatprep.subr.bf16.mxu0 0
    %700 = vmatpush1.bf16.msra.mxu0 %v460
    %701 = vmatprep.subr.bf16.mxu0 0
    %702 = vmatpush1.bf16.msra.mxu0 %v459
    %703 = vmatprep.subr.bf16.mxu0 0
    %704 = vmatpush1.bf16.msra.mxu0 %v458
    %705 = vmatprep.subr.bf16.mxu0 0
    %706 = vmatpush1.bf16.msra.mxu0 %v457
    %707 = vmatprep.subr.bf16.mxu0 0
    %708 = vmatpush2.bf16.msra.mxu0 0
    %709 = vmatprep.subr.bf16.mxu0 0
    %710 = vmatpush2.bf16.msra.mxu0 0
    %711 = vmatprep.subr.bf16.mxu0 0
    %712 = vmatpush2.bf16.msra.mxu0 0
    %713 = vmatprep.subr.bf16.mxu0 0
    %714 = vmatpush2.bf16.msra.mxu0 0
    %715 = vmatprep.subr.bf16.mxu0 0
    %716 = vmatpush2.bf16.msra.mxu0 0
    %717 = vmatprep.subr.bf16.mxu0 0
    %718 = vmatpush2.bf16.msra.mxu0 0
    %719 = vmatprep.subr.bf16.mxu0 0
    %720 = vmatpush2.bf16.msra.mxu0 0
    %721 = vmatprep.subr.bf16.mxu0 0
    %722 = vmatpush2.bf16.msra.mxu0 0
    %723 = vmatprep.mubr.bf16.mxu0 0
    %724 = vmatmul.mubr.bf16.gmra.mxu0 %v526
    %v725 = vpop.f32.mrf.mxu0
    %v726 = vadd.f32 %v689, %v725
    %v727 = vpop.f32.mrf.mxu0
    %v728 = vpop.f32.mrf.mxu0
    %v729 = vadd.f32 %v690, %v728
    %v730 = vpop.f32.mrf.mxu0
    %731 = vdwg.mxu0
    %v732 = vmul.f32 %v726, 0.5
    %v733 = vmul.f32 %v729, 0.5
    %v734 = vtanh.pop %v732
    %v735 = vtanh.pop %v733
    %v736 = vmul.f32 %v734, 0.5
    %v737 = vmul.f32 %v735, 0.5
    %v738 = vadd.f32 %v736, 0.5
    %v739 = vadd.f32 %v737, 0.5
    %v740 = vtanh.pop %v685
    %v741 = vtanh.pop %v686
    %v742 = vmul.f32 %v738, %v740
    %v743 = vmul.f32 %v739, %v741
    %v744 = vpack.c.bf16 %v743, %v742
    %s745 = scalar_lea.vmem [#allocation4], 64
    %v746 = vld [vmem:[%s745] sm:$0xf]
    %v747 = vld [vmem:[%s745 + $0x10] sm:$0xf]
    %v748 = vunpack.c.l.bf16 %v746
    %v749 = vunpack.c.l.bf16 %v747
    %750 = vmatprep.subr.bf16.mxu0 0
    %751 = vmatpush1.bf16.msra.mxu0 %v113
    %752 = vmatprep.subr.bf16.mxu0 0
    %753 = vmatpush1.bf16.msra.mxu0 %v112
    %754 = vmatprep.subr.bf16.mxu0 0
    %755 = vmatpush1.bf16.msra.mxu0 %v111
    %756 = vmatprep.subr.bf16.mxu0 0
    %757 = vmatpush1.bf16.msra.mxu0 %v110
    %758 = vmatprep.subr.bf16.mxu0 0
    %759 = vmatpush1.bf16.msra.mxu0 %v109
    %760 = vmatprep.subr.bf16.mxu0 0
    %761 = vmatpush1.bf16.msra.mxu0 %v108
    %762 = vmatprep.subr.bf16.mxu0 0
    %763 = vmatpush1.bf16.msra.mxu0 %v107
    %764 = vmatprep.subr.bf16.mxu0 0
    %765 = vmatpush1.bf16.msra.mxu0 %v106
    %766 = vmatprep.subr.bf16.mxu0 0
    %767 = vmatpush2.bf16.msra.mxu0 0
    %768 = vmatprep.subr.bf16.mxu0 0
    %769 = vmatpush2.bf16.msra.mxu0 0
    %770 = vmatprep.subr.bf16.mxu0 0
    %771 = vmatpush2.bf16.msra.mxu0 0
    %772 = vmatprep.subr.bf16.mxu0 0
    %773 = vmatpush2.bf16.msra.mxu0 0
    %774 = vmatprep.subr.bf16.mxu0 0
    %775 = vmatpush2.bf16.msra.mxu0 0
    %776 = vmatprep.subr.bf16.mxu0 0
    %777 = vmatpush2.bf16.msra.mxu0 0
    %778 = vmatprep.subr.bf16.mxu0 0
    %779 = vmatpush2.bf16.msra.mxu0 0
    %780 = vmatprep.subr.bf16.mxu0 0
    %781 = vmatpush2.bf16.msra.mxu0 0
    %782 = vmatprep.mubr.bf16.mxu0 0
    %783 = vmatmul.mubr.bf16.gmra.mxu0 %v744
    %v784 = vpop.f32.mrf.mxu0
    %v785 = vadd.f32 %v748, %v784
    %v786 = vpop.f32.mrf.mxu0
    %v787 = vpop.f32.mrf.mxu0
    %v788 = vadd.f32 %v749, %v787
    %v789 = vpop.f32.mrf.mxu0
    %790 = vdwg.mxu0
    %v791 = vmul.f32 %v785, 0.5
    %v792 = vmul.f32 %v788, 0.5
    %v793 = vtanh.pop %v791
    %v794 = vtanh.pop %v792
    %v795 = vmul.f32 %v793, 0.5
    %v796 = vmul.f32 %v794, 0.5
    %v797 = vadd.f32 %v795, 0.5
    %v798 = vadd.f32 %v796, 0.5
    %v799 = vld [vmem:[%s745 + $0xc] sm:$0xf]
    %v800 = vld [vmem:[%s745 + $0x1c] sm:$0xf]
    %v801 = vunpack.c.l.bf16 %v799
    %v802 = vunpack.c.l.bf16 %v800
    %803 = vmatprep.subr.bf16.mxu0 0
    %804 = vmatpush1.bf16.msra.mxu0 %v230
    %805 = vmatprep.subr.bf16.mxu0 0
    %806 = vmatpush1.bf16.msra.mxu0 %v229
    %807 = vmatprep.subr.bf16.mxu0 0
    %808 = vmatpush1.bf16.msra.mxu0 %v228
    %809 = vmatprep.subr.bf16.mxu0 0
    %810 = vmatpush1.bf16.msra.mxu0 %v227
    %811 = vmatprep.subr.bf16.mxu0 0
    %812 = vmatpush1.bf16.msra.mxu0 %v226
    %813 = vmatprep.subr.bf16.mxu0 0
    %814 = vmatpush1.bf16.msra.mxu0 %v225
    %815 = vmatprep.subr.bf16.mxu0 0
    %816 = vmatpush1.bf16.msra.mxu0 %v224
    %817 = vmatprep.subr.bf16.mxu0 0
    %818 = vmatpush1.bf16.msra.mxu0 %v223
    %819 = vmatprep.subr.bf16.mxu0 0
    %820 = vmatpush2.bf16.msra.mxu0 0
    %821 = vmatprep.subr.bf16.mxu0 0
    %822 = vmatpush2.bf16.msra.mxu0 0
    %823 = vmatprep.subr.bf16.mxu0 0
    %824 = vmatpush2.bf16.msra.mxu0 0
    %825 = vmatprep.subr.bf16.mxu0 0
    %826 = vmatpush2.bf16.msra.mxu0 0
    %827 = vmatprep.subr.bf16.mxu0 0
    %828 = vmatpush2.bf16.msra.mxu0 0
    %829 = vmatprep.subr.bf16.mxu0 0
    %830 = vmatpush2.bf16.msra.mxu0 0
    %831 = vmatprep.subr.bf16.mxu0 0
    %832 = vmatpush2.bf16.msra.mxu0 0
    %833 = vmatprep.subr.bf16.mxu0 0
    %834 = vmatpush2.bf16.msra.mxu0 0
    %835 = vmatprep.mubr.bf16.mxu0 0
    %836 = vmatmul.mubr.bf16.gmra.mxu0 %v744
    %v837 = vpop.f32.mrf.mxu0
    %v838 = vadd.f32 %v801, %v837
    %v839 = vpop.f32.mrf.mxu0
    %v840 = vpop.f32.mrf.mxu0
    %v841 = vadd.f32 %v802, %v840
    %v842 = vpop.f32.mrf.mxu0
    %843 = vdwg.mxu0
    %v844 = vtanh.pop %v838
    %v845 = vtanh.pop %v841
    %v846 = vmul.f32 %v797, %v844
    %v847 = vmul.f32 %v798, %v845
    %v848 = vld [vmem:[%s745 + $0x4] sm:$0xf]
    %v849 = vld [vmem:[%s745 + $0x14] sm:$0xf]
    %v850 = vunpack.c.l.bf16 %v848
    %v851 = vunpack.c.l.bf16 %v849
    %852 = vmatprep.subr.bf16.mxu0 0
    %853 = vmatpush1.bf16.msra.mxu0 %v343
    %854 = vmatprep.subr.bf16.mxu0 0
    %855 = vmatpush1.bf16.msra.mxu0 %v342
    %856 = vmatprep.subr.bf16.mxu0 0
    %857 = vmatpush1.bf16.msra.mxu0 %v341
    %858 = vmatprep.subr.bf16.mxu0 0
    %859 = vmatpush1.bf16.msra.mxu0 %v340
    %860 = vmatprep.subr.bf16.mxu0 0
    %861 = vmatpush1.bf16.msra.mxu0 %v339
    %862 = vmatprep.subr.bf16.mxu0 0
    %863 = vmatpush1.bf16.msra.mxu0 %v338
    %864 = vmatprep.subr.bf16.mxu0 0
    %865 = vmatpush1.bf16.msra.mxu0 %v337
    %866 = vmatprep.subr.bf16.mxu0 0
    %867 = vmatpush1.bf16.msra.mxu0 %v336
    %868 = vmatprep.subr.bf16.mxu0 0
    %869 = vmatpush2.bf16.msra.mxu0 0
    %870 = vmatprep.subr.bf16.mxu0 0
    %871 = vmatpush2.bf16.msra.mxu0 0
    %872 = vmatprep.subr.bf16.mxu0 0
    %873 = vmatpush2.bf16.msra.mxu0 0
    %874 = vmatprep.subr.bf16.mxu0 0
    %875 = vmatpush2.bf16.msra.mxu0 0
    %876 = vmatprep.subr.bf16.mxu0 0
    %877 = vmatpush2.bf16.msra.mxu0 0
    %878 = vmatprep.subr.bf16.mxu0 0
    %879 = vmatpush2.bf16.msra.mxu0 0
    %880 = vmatprep.subr.bf16.mxu0 0
    %881 = vmatpush2.bf16.msra.mxu0 0
    %882 = vmatprep.subr.bf16.mxu0 0
    %883 = vmatpush2.bf16.msra.mxu0 0
    %884 = vmatprep.mubr.bf16.mxu0 0
    %885 = vmatmul.mubr.bf16.gmra.mxu0 %v744
    %v886 = vpop.f32.mrf.mxu0
    %v887 = vadd.f32 %v850, %v886
    %v888 = vpop.f32.mrf.mxu0
    %v889 = vpop.f32.mrf.mxu0
    %v890 = vadd.f32 %v851, %v889
    %v891 = vpop.f32.mrf.mxu0
    %892 = vdwg.mxu0
    %v893 = vmul.f32 %v887, 0.5
    %v894 = vmul.f32 %v890, 0.5
    %v895 = vtanh.pop %v893
    %v896 = vtanh.pop %v894
    %v897 = vmul.f32 %v895, 0.5
    %v898 = vmul.f32 %v896, 0.5
    %v899 = vadd.f32 %v897, 0.5
    %v900 = vadd.f32 %v898, 0.5
    %v901 = vmul.f32 %v899, %v685
    %v902 = vmul.f32 %v900, %v686
    %v903 = vadd.f32 %v901, %v846
    %v904 = vadd.f32 %v902, %v847
    %v905 = vld [vmem:[%s745 + $0x8] sm:$0xf]
    %v906 = vld [vmem:[%s745 + $0x18] sm:$0xf]
    %v907 = vunpack.c.l.bf16 %v905
    %v908 = vunpack.c.l.bf16 %v906
    %909 = vmatprep.subr.bf16.mxu0 0
    %910 = vmatpush1.bf16.msra.mxu0 %v464
    %911 = vmatprep.subr.bf16.mxu0 0
    %912 = vmatpush1.bf16.msra.mxu0 %v463
    %913 = vmatprep.subr.bf16.mxu0 0
    %914 = vmatpush1.bf16.msra.mxu0 %v462
    %915 = vmatprep.subr.bf16.mxu0 0
    %916 = vmatpush1.bf16.msra.mxu0 %v461
    %917 = vmatprep.subr.bf16.mxu0 0
    %918 = vmatpush1.bf16.msra.mxu0 %v460
    %919 = vmatprep.subr.bf16.mxu0 0
    %920 = vmatpush1.bf16.msra.mxu0 %v459
    %921 = vmatprep.subr.bf16.mxu0 0
    %922 = vmatpush1.bf16.msra.mxu0 %v458
    %923 = vmatprep.subr.bf16.mxu0 0
    %924 = vmatpush1.bf16.msra.mxu0 %v457
    %925 = vmatprep.subr.bf16.mxu0 0
    %926 = vmatpush2.bf16.msra.mxu0 0
    %927 = vmatprep.subr.bf16.mxu0 0
    %928 = vmatpush2.bf16.msra.mxu0 0
    %929 = vmatprep.subr.bf16.mxu0 0
    %930 = vmatpush2.bf16.msra.mxu0 0
    %931 = vmatprep.subr.bf16.mxu0 0
    %932 = vmatpush2.bf16.msra.mxu0 0
    %933 = vmatprep.subr.bf16.mxu0 0
    %934 = vmatpush2.bf16.msra.mxu0 0
    %935 = vmatprep.subr.bf16.mxu0 0
    %936 = vmatpush2.bf16.msra.mxu0 0
    %937 = vmatprep.subr.bf16.mxu0 0
    %938 = vmatpush2.bf16.msra.mxu0 0
    %939 = vmatprep.subr.bf16.mxu0 0
    %940 = vmatpush2.bf16.msra.mxu0 0
    %941 = vmatprep.mubr.bf16.mxu0 0
    %942 = vmatmul.mubr.bf16.gmra.mxu0 %v744
    %v943 = vpop.f32.mrf.mxu0
    %v944 = vadd.f32 %v907, %v943
    %v945 = vpop.f32.mrf.mxu0
    %v946 = vpop.f32.mrf.mxu0
    %v947 = vadd.f32 %v908, %v946
    %v948 = vpop.f32.mrf.mxu0
    %949 = vdwg.mxu0
    %v950 = vmul.f32 %v944, 0.5
    %v951 = vmul.f32 %v947, 0.5
    %v952 = vtanh.pop %v950
    %v953 = vtanh.pop %v951
    %v954 = vmul.f32 %v952, 0.5
    %v955 = vmul.f32 %v953, 0.5
    %v956 = vadd.f32 %v954, 0.5
    %v957 = vadd.f32 %v955, 0.5
    %v958 = vtanh.pop %v903
    %v959 = vtanh.pop %v904
    %v960 = vmul.f32 %v956, %v958
    %v961 = vmul.f32 %v957, %v959
    %v962 = vpack.c.bf16 %v961, %v960
    %s963 = scalar_lea.vmem [#allocation4], 96
    %v964 = vld [vmem:[%s963] sm:$0xf]
    %v965 = vld [vmem:[%s963 + $0x10] sm:$0xf]
    %v966 = vunpack.c.l.bf16 %v964
    %v967 = vunpack.c.l.bf16 %v965
    %968 = vmatprep.subr.bf16.mxu0 0
    %969 = vmatpush1.bf16.msra.mxu0 %v113
    %970 = vmatprep.subr.bf16.mxu0 0
    %971 = vmatpush1.bf16.msra.mxu0 %v112
    %972 = vmatprep.subr.bf16.mxu0 0
    %973 = vmatpush1.bf16.msra.mxu0 %v111
    %974 = vmatprep.subr.bf16.mxu0 0
    %975 = vmatpush1.bf16.msra.mxu0 %v110
    %976 = vmatprep.subr.bf16.mxu0 0
    %977 = vmatpush1.bf16.msra.mxu0 %v109
    %978 = vmatprep.subr.bf16.mxu0 0
    %979 = vmatpush1.bf16.msra.mxu0 %v108
    %980 = vmatprep.subr.bf16.mxu0 0
    %981 = vmatpush1.bf16.msra.mxu0 %v107
    %982 = vmatprep.subr.bf16.mxu0 0
    %983 = vmatpush1.bf16.msra.mxu0 %v106
    %984 = vmatprep.subr.bf16.mxu0 0
    %985 = vmatpush2.bf16.msra.mxu0 0
    %986 = vmatprep.subr.bf16.mxu0 0
    %987 = vmatpush2.bf16.msra.mxu0 0
    %988 = vmatprep.subr.bf16.mxu0 0
    %989 = vmatpush2.bf16.msra.mxu0 0
    %990 = vmatprep.subr.bf16.mxu0 0
    %991 = vmatpush2.bf16.msra.mxu0 0
    %992 = vmatprep.subr.bf16.mxu0 0
    %993 = vmatpush2.bf16.msra.mxu0 0
    %994 = vmatprep.subr.bf16.mxu0 0
    %995 = vmatpush2.bf16.msra.mxu0 0
    %996 = vmatprep.subr.bf16.mxu0 0
    %997 = vmatpush2.bf16.msra.mxu0 0
    %998 = vmatprep.subr.bf16.mxu0 0
    %999 = vmatpush2.bf16.msra.mxu0 0
    %1000 = vmatprep.mubr.bf16.mxu0 0
    %1001 = vmatmul.mubr.bf16.gmra.mxu0 %v962
    %v1002 = vpop.f32.mrf.mxu0
    %v1003 = vadd.f32 %v966, %v1002
    %v1004 = vpop.f32.mrf.mxu0
    %v1005 = vpop.f32.mrf.mxu0
    %v1006 = vadd.f32 %v967, %v1005
    %v1007 = vpop.f32.mrf.mxu0
    %1008 = vdwg.mxu0
    %v1009 = vmul.f32 %v1003, 0.5
    %v1010 = vmul.f32 %v1006, 0.5
    %v1011 = vtanh.pop %v1009
    %v1012 = vtanh.pop %v1010
    %v1013 = vmul.f32 %v1011, 0.5
    %v1014 = vmul.f32 %v1012, 0.5
    %v1015 = vadd.f32 %v1013, 0.5
    %v1016 = vadd.f32 %v1014, 0.5
    %v1017 = vld [vmem:[%s963 + $0xc] sm:$0xf]
    %v1018 = vld [vmem:[%s963 + $0x1c] sm:$0xf]
    %v1019 = vunpack.c.l.bf16 %v1017
    %v1020 = vunpack.c.l.bf16 %v1018
    %1021 = vmatprep.subr.bf16.mxu0 0
    %1022 = vmatpush1.bf16.msra.mxu0 %v230
    %1023 = vmatprep.subr.bf16.mxu0 0
    %1024 = vmatpush1.bf16.msra.mxu0 %v229
    %1025 = vmatprep.subr.bf16.mxu0 0
    %1026 = vmatpush1.bf16.msra.mxu0 %v228
    %1027 = vmatprep.subr.bf16.mxu0 0
    %1028 = vmatpush1.bf16.msra.mxu0 %v227
    %1029 = vmatprep.subr.bf16.mxu0 0
    %1030 = vmatpush1.bf16.msra.mxu0 %v226
    %1031 = vmatprep.subr.bf16.mxu0 0
    %1032 = vmatpush1.bf16.msra.mxu0 %v225
    %1033 = vmatprep.subr.bf16.mxu0 0
    %1034 = vmatpush1.bf16.msra.mxu0 %v224
    %1035 = vmatprep.subr.bf16.mxu0 0
    %1036 = vmatpush1.bf16.msra.mxu0 %v223
    %1037 = vmatprep.subr.bf16.mxu0 0
    %1038 = vmatpush2.bf16.msra.mxu0 0
    %1039 = vmatprep.subr.bf16.mxu0 0
    %1040 = vmatpush2.bf16.msra.mxu0 0
    %1041 = vmatprep.subr.bf16.mxu0 0
    %1042 = vmatpush2.bf16.msra.mxu0 0
    %1043 = vmatprep.subr.bf16.mxu0 0
    %1044 = vmatpush2.bf16.msra.mxu0 0
    %1045 = vmatprep.subr.bf16.mxu0 0
    %1046 = vmatpush2.bf16.msra.mxu0 0
    %1047 = vmatprep.subr.bf16.mxu0 0
    %1048 = vmatpush2.bf16.msra.mxu0 0
    %1049 = vmatprep.subr.bf16.mxu0 0
    %1050 = vmatpush2.bf16.msra.mxu0 0
    %1051 = vmatprep.subr.bf16.mxu0 0
    %1052 = vmatpush2.bf16.msra.mxu0 0
    %1053 = vmatprep.mubr.bf16.mxu0 0
    %1054 = vmatmul.mubr.bf16.gmra.mxu0 %v962
    %v1055 = vpop.f32.mrf.mxu0
    %v1056 = vadd.f32 %v1019, %v1055
    %v1057 = vpop.f32.mrf.mxu0
    %v1058 = vpop.f32.mrf.mxu0
    %v1059 = vadd.f32 %v1020, %v1058
    %v1060 = vpop.f32.mrf.mxu0
    %1061 = vdwg.mxu0
    %v1062 = vtanh.pop %v1056
    %v1063 = vtanh.pop %v1059
    %v1064 = vmul.f32 %v1015, %v1062
    %v1065 = vmul.f32 %v1016, %v1063
    %v1066 = vld [vmem:[%s963 + $0x4] sm:$0xf]
    %v1067 = vld [vmem:[%s963 + $0x14] sm:$0xf]
    %v1068 = vunpack.c.l.bf16 %v1066
    %v1069 = vunpack.c.l.bf16 %v1067
    %1070 = vmatprep.subr.bf16.mxu0 0
    %1071 = vmatpush1.bf16.msra.mxu0 %v343
    %1072 = vmatprep.subr.bf16.mxu0 0
    %1073 = vmatpush1.bf16.msra.mxu0 %v342
    %1074 = vmatprep.subr.bf16.mxu0 0
    %1075 = vmatpush1.bf16.msra.mxu0 %v341
    %1076 = vmatprep.subr.bf16.mxu0 0
    %1077 = vmatpush1.bf16.msra.mxu0 %v340
    %1078 = vmatprep.subr.bf16.mxu0 0
    %1079 = vmatpush1.bf16.msra.mxu0 %v339
    %1080 = vmatprep.subr.bf16.mxu0 0
    %1081 = vmatpush1.bf16.msra.mxu0 %v338
    %1082 = vmatprep.subr.bf16.mxu0 0
    %1083 = vmatpush1.bf16.msra.mxu0 %v337
    %1084 = vmatprep.subr.bf16.mxu0 0
    %1085 = vmatpush1.bf16.msra.mxu0 %v336
    %1086 = vmatprep.subr.bf16.mxu0 0
    %1087 = vmatpush2.bf16.msra.mxu0 0
    %1088 = vmatprep.subr.bf16.mxu0 0
    %1089 = vmatpush2.bf16.msra.mxu0 0
    %1090 = vmatprep.subr.bf16.mxu0 0
    %1091 = vmatpush2.bf16.msra.mxu0 0
    %1092 = vmatprep.subr.bf16.mxu0 0
    %1093 = vmatpush2.bf16.msra.mxu0 0
    %1094 = vmatprep.subr.bf16.mxu0 0
    %1095 = vmatpush2.bf16.msra.mxu0 0
    %1096 = vmatprep.subr.bf16.mxu0 0
    %1097 = vmatpush2.bf16.msra.mxu0 0
    %1098 = vmatprep.subr.bf16.mxu0 0
    %1099 = vmatpush2.bf16.msra.mxu0 0
    %1100 = vmatprep.subr.bf16.mxu0 0
    %1101 = vmatpush2.bf16.msra.mxu0 0
    %1102 = vmatprep.mubr.bf16.mxu0 0
    %1103 = vmatmul.mubr.bf16.gmra.mxu0 %v962
    %v1104 = vpop.f32.mrf.mxu0
    %v1105 = vadd.f32 %v1068, %v1104
    %v1106 = vpop.f32.mrf.mxu0
    %v1107 = vpop.f32.mrf.mxu0
    %v1108 = vadd.f32 %v1069, %v1107
    %v1109 = vpop.f32.mrf.mxu0
    %1110 = vdwg.mxu0
    %v1111 = vmul.f32 %v1105, 0.5
    %v1112 = vmul.f32 %v1108, 0.5
    %v1113 = vtanh.pop %v1111
    %v1114 = vtanh.pop %v1112
    %v1115 = vmul.f32 %v1113, 0.5
    %v1116 = vmul.f32 %v1114, 0.5
    %v1117 = vadd.f32 %v1115, 0.5
    %v1118 = vadd.f32 %v1116, 0.5
    %v1119 = vmul.f32 %v1117, %v903
    %v1120 = vmul.f32 %v1118, %v904
    %v1121 = vadd.f32 %v1119, %v1064
    %v1122 = vadd.f32 %v1120, %v1065
    %v1123 = vld [vmem:[%s963 + $0x8] sm:$0xf]
    %v1124 = vld [vmem:[%s963 + $0x18] sm:$0xf]
    %v1125 = vunpack.c.l.bf16 %v1123
    %v1126 = vunpack.c.l.bf16 %v1124
    %1127 = vmatprep.subr.bf16.mxu0 0
    %1128 = vmatpush1.bf16.msra.mxu0 %v464
    %1129 = vmatprep.subr.bf16.mxu0 0
    %1130 = vmatpush1.bf16.msra.mxu0 %v463
    %1131 = vmatprep.subr.bf16.mxu0 0
    %1132 = vmatpush1.bf16.msra.mxu0 %v462
    %1133 = vmatprep.subr.bf16.mxu0 0
    %1134 = vmatpush1.bf16.msra.mxu0 %v461
    %1135 = vmatprep.subr.bf16.mxu0 0
    %1136 = vmatpush1.bf16.msra.mxu0 %v460
    %1137 = vmatprep.subr.bf16.mxu0 0
    %1138 = vmatpush1.bf16.msra.mxu0 %v459
    %1139 = vmatprep.subr.bf16.mxu0 0
    %1140 = vmatpush1.bf16.msra.mxu0 %v458
    %1141 = vmatprep.subr.bf16.mxu0 0
    %1142 = vmatpush1.bf16.msra.mxu0 %v457
    %1143 = vmatprep.subr.bf16.mxu0 0
    %1144 = vmatpush2.bf16.msra.mxu0 0
    %1145 = vmatprep.subr.bf16.mxu0 0
    %1146 = vmatpush2.bf16.msra.mxu0 0
    %1147 = vmatprep.subr.bf16.mxu0 0
    %1148 = vmatpush2.bf16.msra.mxu0 0
    %1149 = vmatprep.subr.bf16.mxu0 0
    %1150 = vmatpush2.bf16.msra.mxu0 0
    %1151 = vmatprep.subr.bf16.mxu0 0
    %1152 = vmatpush2.bf16.msra.mxu0 0
    %1153 = vmatprep.subr.bf16.mxu0 0
    %1154 = vmatpush2.bf16.msra.mxu0 0
    %1155 = vmatprep.subr.bf16.mxu0 0
    %1156 = vmatpush2.bf16.msra.mxu0 0
    %1157 = vmatprep.subr.bf16.mxu0 0
    %1158 = vmatpush2.bf16.msra.mxu0 0
    %1159 = vmatprep.mubr.bf16.mxu0 0
    %1160 = vmatmul.mubr.bf16.gmra.mxu0 %v962
    %v1161 = vpop.f32.mrf.mxu0
    %v1162 = vadd.f32 %v1125, %v1161
    %v1163 = vpop.f32.mrf.mxu0
    %v1164 = vpop.f32.mrf.mxu0
    %v1165 = vadd.f32 %v1126, %v1164
    %v1166 = vpop.f32.mrf.mxu0
    %1167 = vdwg.mxu0
    %v1168 = vmul.f32 %v1162, 0.5
    %v1169 = vmul.f32 %v1165, 0.5
    %v1170 = vtanh.pop %v1168
    %v1171 = vtanh.pop %v1169
    %v1172 = vmul.f32 %v1170, 0.5
    %v1173 = vmul.f32 %v1171, 0.5
    %v1174 = vadd.f32 %v1172, 0.5
    %v1175 = vadd.f32 %v1173, 0.5
    %v1176 = vtanh.pop %v1121
    %v1177 = vtanh.pop %v1122
    %v1178 = vmul.f32 %v1174, %v1176
    %v1179 = vmul.f32 %v1175, %v1177
    %v1180 = vpack.c.bf16 %v1179, %v1178
    %s1181 = scalar_lea.vmem [#allocation4], 128
    %v1182 = vld [vmem:[%s1181] sm:$0xf]
    %v1183 = vld [vmem:[%s1181 + $0x10] sm:$0xf]
    %v1184 = vunpack.c.l.bf16 %v1182
    %v1185 = vunpack.c.l.bf16 %v1183
    %1186 = vmatprep.subr.bf16.mxu0 0
    %1187 = vmatpush1.bf16.msra.mxu0 %v113
    %1188 = vmatprep.subr.bf16.mxu0 0
    %1189 = vmatpush1.bf16.msra.mxu0 %v112
    %1190 = vmatprep.subr.bf16.mxu0 0
    %1191 = vmatpush1.bf16.msra.mxu0 %v111
    %1192 = vmatprep.subr.bf16.mxu0 0
    %1193 = vmatpush1.bf16.msra.mxu0 %v110
    %1194 = vmatprep.subr.bf16.mxu0 0
    %1195 = vmatpush1.bf16.msra.mxu0 %v109
    %1196 = vmatprep.subr.bf16.mxu0 0
    %1197 = vmatpush1.bf16.msra.mxu0 %v108
    %1198 = vmatprep.subr.bf16.mxu0 0
    %1199 = vmatpush1.bf16.msra.mxu0 %v107
    %1200 = vmatprep.subr.bf16.mxu0 0
    %1201 = vmatpush1.bf16.msra.mxu0 %v106
    %1202 = vmatprep.subr.bf16.mxu0 0
    %1203 = vmatpush2.bf16.msra.mxu0 0
    %1204 = vmatprep.subr.bf16.mxu0 0
    %1205 = vmatpush2.bf16.msra.mxu0 0
    %1206 = vmatprep.subr.bf16.mxu0 0
    %1207 = vmatpush2.bf16.msra.mxu0 0
    %1208 = vmatprep.subr.bf16.mxu0 0
    %1209 = vmatpush2.bf16.msra.mxu0 0
    %1210 = vmatprep.subr.bf16.mxu0 0
    %1211 = vmatpush2.bf16.msra.mxu0 0
    %1212 = vmatprep.subr.bf16.mxu0 0
    %1213 = vmatpush2.bf16.msra.mxu0 0
    %1214 = vmatprep.subr.bf16.mxu0 0
    %1215 = vmatpush2.bf16.msra.mxu0 0
    %1216 = vmatprep.subr.bf16.mxu0 0
    %1217 = vmatpush2.bf16.msra.mxu0 0
    %1218 = vmatprep.mubr.bf16.mxu0 0
    %1219 = vmatmul.mubr.bf16.gmra.mxu0 %v1180
    %v1220 = vpop.f32.mrf.mxu0
    %v1221 = vadd.f32 %v1184, %v1220
    %v1222 = vpop.f32.mrf.mxu0
    %v1223 = vpop.f32.mrf.mxu0
    %v1224 = vadd.f32 %v1185, %v1223
    %v1225 = vpop.f32.mrf.mxu0
    %1226 = vdwg.mxu0
    %v1227 = vmul.f32 %v1221, 0.5
    %v1228 = vmul.f32 %v1224, 0.5
    %v1229 = vtanh.pop %v1227
    %v1230 = vtanh.pop %v1228
    %v1231 = vmul.f32 %v1229, 0.5
    %v1232 = vmul.f32 %v1230, 0.5
    %v1233 = vadd.f32 %v1231, 0.5
    %v1234 = vadd.f32 %v1232, 0.5
    %v1235 = vld [vmem:[%s1181 + $0xc] sm:$0xf]
    %v1236 = vld [vmem:[%s1181 + $0x1c] sm:$0xf]
    %v1237 = vunpack.c.l.bf16 %v1235
    %v1238 = vunpack.c.l.bf16 %v1236
    %1239 = vmatprep.subr.bf16.mxu0 0
    %1240 = vmatpush1.bf16.msra.mxu0 %v230
    %1241 = vmatprep.subr.bf16.mxu0 0
    %1242 = vmatpush1.bf16.msra.mxu0 %v229
    %1243 = vmatprep.subr.bf16.mxu0 0
    %1244 = vmatpush1.bf16.msra.mxu0 %v228
    %1245 = vmatprep.subr.bf16.mxu0 0
    %1246 = vmatpush1.bf16.msra.mxu0 %v227
    %1247 = vmatprep.subr.bf16.mxu0 0
    %1248 = vmatpush1.bf16.msra.mxu0 %v226
    %1249 = vmatprep.subr.bf16.mxu0 0
    %1250 = vmatpush1.bf16.msra.mxu0 %v225
    %1251 = vmatprep.subr.bf16.mxu0 0
    %1252 = vmatpush1.bf16.msra.mxu0 %v224
    %1253 = vmatprep.subr.bf16.mxu0 0
    %1254 = vmatpush1.bf16.msra.mxu0 %v223
    %1255 = vmatprep.subr.bf16.mxu0 0
    %1256 = vmatpush2.bf16.msra.mxu0 0
    %1257 = vmatprep.subr.bf16.mxu0 0
    %1258 = vmatpush2.bf16.msra.mxu0 0
    %1259 = vmatprep.subr.bf16.mxu0 0
    %1260 = vmatpush2.bf16.msra.mxu0 0
    %1261 = vmatprep.subr.bf16.mxu0 0
    %1262 = vmatpush2.bf16.msra.mxu0 0
    %1263 = vmatprep.subr.bf16.mxu0 0
    %1264 = vmatpush2.bf16.msra.mxu0 0
    %1265 = vmatprep.subr.bf16.mxu0 0
    %1266 = vmatpush2.bf16.msra.mxu0 0
    %1267 = vmatprep.subr.bf16.mxu0 0
    %1268 = vmatpush2.bf16.msra.mxu0 0
    %1269 = vmatprep.subr.bf16.mxu0 0
    %1270 = vmatpush2.bf16.msra.mxu0 0
    %1271 = vmatprep.mubr.bf16.mxu0 0
    %1272 = vmatmul.mubr.bf16.gmra.mxu0 %v1180
    %v1273 = vpop.f32.mrf.mxu0
    %v1274 = vadd.f32 %v1237, %v1273
    %v1275 = vpop.f32.mrf.mxu0
    %v1276 = vpop.f32.mrf.mxu0
    %v1277 = vadd.f32 %v1238, %v1276
    %v1278 = vpop.f32.mrf.mxu0
    %1279 = vdwg.mxu0
    %v1280 = vtanh.pop %v1274
    %v1281 = vtanh.pop %v1277
    %v1282 = vmul.f32 %v1233, %v1280
    %v1283 = vmul.f32 %v1234, %v1281
    %v1284 = vld [vmem:[%s1181 + $0x4] sm:$0xf]
    %v1285 = vld [vmem:[%s1181 + $0x14] sm:$0xf]
    %v1286 = vunpack.c.l.bf16 %v1284
    %v1287 = vunpack.c.l.bf16 %v1285
    %1288 = vmatprep.subr.bf16.mxu0 0
    %1289 = vmatpush1.bf16.msra.mxu0 %v343
    %1290 = vmatprep.subr.bf16.mxu0 0
    %1291 = vmatpush1.bf16.msra.mxu0 %v342
    %1292 = vmatprep.subr.bf16.mxu0 0
    %1293 = vmatpush1.bf16.msra.mxu0 %v341
    %1294 = vmatprep.subr.bf16.mxu0 0
    %1295 = vmatpush1.bf16.msra.mxu0 %v340
    %1296 = vmatprep.subr.bf16.mxu0 0
    %1297 = vmatpush1.bf16.msra.mxu0 %v339
    %1298 = vmatprep.subr.bf16.mxu0 0
    %1299 = vmatpush1.bf16.msra.mxu0 %v338
    %1300 = vmatprep.subr.bf16.mxu0 0
    %1301 = vmatpush1.bf16.msra.mxu0 %v337
    %1302 = vmatprep.subr.bf16.mxu0 0
    %1303 = vmatpush1.bf16.msra.mxu0 %v336
    %1304 = vmatprep.subr.bf16.mxu0 0
    %1305 = vmatpush2.bf16.msra.mxu0 0
    %1306 = vmatprep.subr.bf16.mxu0 0
    %1307 = vmatpush2.bf16.msra.mxu0 0
    %1308 = vmatprep.subr.bf16.mxu0 0
    %1309 = vmatpush2.bf16.msra.mxu0 0
    %1310 = vmatprep.subr.bf16.mxu0 0
    %1311 = vmatpush2.bf16.msra.mxu0 0
    %1312 = vmatprep.subr.bf16.mxu0 0
    %1313 = vmatpush2.bf16.msra.mxu0 0
    %1314 = vmatprep.subr.bf16.mxu0 0
    %1315 = vmatpush2.bf16.msra.mxu0 0
    %1316 = vmatprep.subr.bf16.mxu0 0
    %1317 = vmatpush2.bf16.msra.mxu0 0
    %1318 = vmatprep.subr.bf16.mxu0 0
    %1319 = vmatpush2.bf16.msra.mxu0 0
    %1320 = vmatprep.mubr.bf16.mxu0 0
    %1321 = vmatmul.mubr.bf16.gmra.mxu0 %v1180
    %v1322 = vpop.f32.mrf.mxu0
    %v1323 = vadd.f32 %v1286, %v1322
    %v1324 = vpop.f32.mrf.mxu0
    %v1325 = vpop.f32.mrf.mxu0
    %v1326 = vadd.f32 %v1287, %v1325
    %v1327 = vpop.f32.mrf.mxu0
    %1328 = vdwg.mxu0
    %v1329 = vmul.f32 %v1323, 0.5
    %v1330 = vmul.f32 %v1326, 0.5
    %v1331 = vtanh.pop %v1329
    %v1332 = vtanh.pop %v1330
    %v1333 = vmul.f32 %v1331, 0.5
    %v1334 = vmul.f32 %v1332, 0.5
    %v1335 = vadd.f32 %v1333, 0.5
    %v1336 = vadd.f32 %v1334, 0.5
    %v1337 = vmul.f32 %v1335, %v1121
    %v1338 = vmul.f32 %v1336, %v1122
    %v1339 = vadd.f32 %v1337, %v1282
    %v1340 = vadd.f32 %v1338, %v1283
    %v1341 = vld [vmem:[%s1181 + $0x8] sm:$0xf]
    %v1342 = vld [vmem:[%s1181 + $0x18] sm:$0xf]
    %v1343 = vunpack.c.l.bf16 %v1341
    %v1344 = vunpack.c.l.bf16 %v1342
    %1345 = vmatprep.subr.bf16.mxu0 0
    %1346 = vmatpush1.bf16.msra.mxu0 %v464
    %1347 = vmatprep.subr.bf16.mxu0 0
    %1348 = vmatpush1.bf16.msra.mxu0 %v463
    %1349 = vmatprep.subr.bf16.mxu0 0
    %1350 = vmatpush1.bf16.msra.mxu0 %v462
    %1351 = vmatprep.subr.bf16.mxu0 0
    %1352 = vmatpush1.bf16.msra.mxu0 %v461
    %1353 = vmatprep.subr.bf16.mxu0 0
    %1354 = vmatpush1.bf16.msra.mxu0 %v460
    %1355 = vmatprep.subr.bf16.mxu0 0
    %1356 = vmatpush1.bf16.msra.mxu0 %v459
    %1357 = vmatprep.subr.bf16.mxu0 0
    %1358 = vmatpush1.bf16.msra.mxu0 %v458
    %1359 = vmatprep.subr.bf16.mxu0 0
    %1360 = vmatpush1.bf16.msra.mxu0 %v457
    %1361 = vmatprep.subr.bf16.mxu0 0
    %1362 = vmatpush2.bf16.msra.mxu0 0
    %1363 = vmatprep.subr.bf16.mxu0 0
    %1364 = vmatpush2.bf16.msra.mxu0 0
    %1365 = vmatprep.subr.bf16.mxu0 0
    %1366 = vmatpush2.bf16.msra.mxu0 0
    %1367 = vmatprep.subr.bf16.mxu0 0
    %1368 = vmatpush2.bf16.msra.mxu0 0
    %1369 = vmatprep.subr.bf16.mxu0 0
    %1370 = vmatpush2.bf16.msra.mxu0 0
    %1371 = vmatprep.subr.bf16.mxu0 0
    %1372 = vmatpush2.bf16.msra.mxu0 0
    %1373 = vmatprep.subr.bf16.mxu0 0
    %1374 = vmatpush2.bf16.msra.mxu0 0
    %1375 = vmatprep.subr.bf16.mxu0 0
    %1376 = vmatpush2.bf16.msra.mxu0 0
    %1377 = vmatprep.mubr.bf16.mxu0 0
    %1378 = vmatmul.mubr.bf16.gmra.mxu0 %v1180
    %v1379 = vpop.f32.mrf.mxu0
    %v1380 = vadd.f32 %v1343, %v1379
    %v1381 = vpop.f32.mrf.mxu0
    %v1382 = vpop.f32.mrf.mxu0
    %v1383 = vadd.f32 %v1344, %v1382
    %v1384 = vpop.f32.mrf.mxu0
    %1385 = vdwg.mxu0
    %v1386 = vmul.f32 %v1380, 0.5
    %v1387 = vmul.f32 %v1383, 0.5
    %v1388 = vtanh.pop %v1386
    %v1389 = vtanh.pop %v1387
    %v1390 = vmul.f32 %v1388, 0.5
    %v1391 = vmul.f32 %v1389, 0.5
    %v1392 = vadd.f32 %v1390, 0.5
    %v1393 = vadd.f32 %v1391, 0.5
    %v1394 = vtanh.pop %v1339
    %v1395 = vtanh.pop %v1340
    %v1396 = vmul.f32 %v1392, %v1394
    %v1397 = vmul.f32 %v1393, %v1395
    %v1398 = vpack.c.bf16 %v1397, %v1396
    %s1399 = scalar_lea.vmem [#allocation4], 160
    %v1400 = vld [vmem:[%s1399] sm:$0xf]
    %v1401 = vld [vmem:[%s1399 + $0x10] sm:$0xf]
    %v1402 = vunpack.c.l.bf16 %v1400
    %v1403 = vunpack.c.l.bf16 %v1401
    %1404 = vmatprep.subr.bf16.mxu0 0
    %1405 = vmatpush1.bf16.msra.mxu0 %v113
    %1406 = vmatprep.subr.bf16.mxu0 0
    %1407 = vmatpush1.bf16.msra.mxu0 %v112
    %1408 = vmatprep.subr.bf16.mxu0 0
    %1409 = vmatpush1.bf16.msra.mxu0 %v111
    %1410 = vmatprep.subr.bf16.mxu0 0
    %1411 = vmatpush1.bf16.msra.mxu0 %v110
    %1412 = vmatprep.subr.bf16.mxu0 0
    %1413 = vmatpush1.bf16.msra.mxu0 %v109
    %1414 = vmatprep.subr.bf16.mxu0 0
    %1415 = vmatpush1.bf16.msra.mxu0 %v108
    %1416 = vmatprep.subr.bf16.mxu0 0
    %1417 = vmatpush1.bf16.msra.mxu0 %v107
    %1418 = vmatprep.subr.bf16.mxu0 0
    %1419 = vmatpush1.bf16.msra.mxu0 %v106
    %1420 = vmatprep.subr.bf16.mxu0 0
    %1421 = vmatpush2.bf16.msra.mxu0 0
    %1422 = vmatprep.subr.bf16.mxu0 0
    %1423 = vmatpush2.bf16.msra.mxu0 0
    %1424 = vmatprep.subr.bf16.mxu0 0
    %1425 = vmatpush2.bf16.msra.mxu0 0
    %1426 = vmatprep.subr.bf16.mxu0 0
    %1427 = vmatpush2.bf16.msra.mxu0 0
    %1428 = vmatprep.subr.bf16.mxu0 0
    %1429 = vmatpush2.bf16.msra.mxu0 0
    %1430 = vmatprep.subr.bf16.mxu0 0
    %1431 = vmatpush2.bf16.msra.mxu0 0
    %1432 = vmatprep.subr.bf16.mxu0 0
    %1433 = vmatpush2.bf16.msra.mxu0 0
    %1434 = vmatprep.subr.bf16.mxu0 0
    %1435 = vmatpush2.bf16.msra.mxu0 0
    %1436 = vmatprep.mubr.bf16.mxu0 0
    %1437 = vmatmul.mubr.bf16.gmra.mxu0 %v1398
    %v1438 = vpop.f32.mrf.mxu0
    %v1439 = vadd.f32 %v1402, %v1438
    %v1440 = vpop.f32.mrf.mxu0
    %v1441 = vpop.f32.mrf.mxu0
    %v1442 = vadd.f32 %v1403, %v1441
    %v1443 = vpop.f32.mrf.mxu0
    %1444 = vdwg.mxu0
    %v1445 = vmul.f32 %v1439, 0.5
    %v1446 = vmul.f32 %v1442, 0.5
    %v1447 = vtanh.pop %v1445
    %v1448 = vtanh.pop %v1446
    %v1449 = vmul.f32 %v1447, 0.5
    %v1450 = vmul.f32 %v1448, 0.5
    %v1451 = vadd.f32 %v1449, 0.5
    %v1452 = vadd.f32 %v1450, 0.5
    %v1453 = vld [vmem:[%s1399 + $0xc] sm:$0xf]
    %v1454 = vld [vmem:[%s1399 + $0x1c] sm:$0xf]
    %v1455 = vunpack.c.l.bf16 %v1453
    %v1456 = vunpack.c.l.bf16 %v1454
    %1457 = vmatprep.subr.bf16.mxu0 0
    %1458 = vmatpush1.bf16.msra.mxu0 %v230
    %1459 = vmatprep.subr.bf16.mxu0 0
    %1460 = vmatpush1.bf16.msra.mxu0 %v229
    %1461 = vmatprep.subr.bf16.mxu0 0
    %1462 = vmatpush1.bf16.msra.mxu0 %v228
    %1463 = vmatprep.subr.bf16.mxu0 0
    %1464 = vmatpush1.bf16.msra.mxu0 %v227
    %1465 = vmatprep.subr.bf16.mxu0 0
    %1466 = vmatpush1.bf16.msra.mxu0 %v226
    %1467 = vmatprep.subr.bf16.mxu0 0
    %1468 = vmatpush1.bf16.msra.mxu0 %v225
    %1469 = vmatprep.subr.bf16.mxu0 0
    %1470 = vmatpush1.bf16.msra.mxu0 %v224
    %1471 = vmatprep.subr.bf16.mxu0 0
    %1472 = vmatpush1.bf16.msra.mxu0 %v223
    %1473 = vmatprep.subr.bf16.mxu0 0
    %1474 = vmatpush2.bf16.msra.mxu0 0
    %1475 = vmatprep.subr.bf16.mxu0 0
    %1476 = vmatpush2.bf16.msra.mxu0 0
    %1477 = vmatprep.subr.bf16.mxu0 0
    %1478 = vmatpush2.bf16.msra.mxu0 0
    %1479 = vmatprep.subr.bf16.mxu0 0
    %1480 = vmatpush2.bf16.msra.mxu0 0
    %1481 = vmatprep.subr.bf16.mxu0 0
    %1482 = vmatpush2.bf16.msra.mxu0 0
    %1483 = vmatprep.subr.bf16.mxu0 0
    %1484 = vmatpush2.bf16.msra.mxu0 0
    %1485 = vmatprep.subr.bf16.mxu0 0
    %1486 = vmatpush2.bf16.msra.mxu0 0
    %1487 = vmatprep.subr.bf16.mxu0 0
    %1488 = vmatpush2.bf16.msra.mxu0 0
    %1489 = vmatprep.mubr.bf16.mxu0 0
    %1490 = vmatmul.mubr.bf16.gmra.mxu0 %v1398
    %v1491 = vpop.f32.mrf.mxu0
    %v1492 = vadd.f32 %v1455, %v1491
    %v1493 = vpop.f32.mrf.mxu0
    %v1494 = vpop.f32.mrf.mxu0
    %v1495 = vadd.f32 %v1456, %v1494
    %v1496 = vpop.f32.mrf.mxu0
    %1497 = vdwg.mxu0
    %v1498 = vtanh.pop %v1492
    %v1499 = vtanh.pop %v1495
    %v1500 = vmul.f32 %v1451, %v1498
    %v1501 = vmul.f32 %v1452, %v1499
    %v1502 = vld [vmem:[%s1399 + $0x4] sm:$0xf]
    %v1503 = vld [vmem:[%s1399 + $0x14] sm:$0xf]
    %v1504 = vunpack.c.l.bf16 %v1502
    %v1505 = vunpack.c.l.bf16 %v1503
    %1506 = vmatprep.subr.bf16.mxu0 0
    %1507 = vmatpush1.bf16.msra.mxu0 %v343
    %1508 = vmatprep.subr.bf16.mxu0 0
    %1509 = vmatpush1.bf16.msra.mxu0 %v342
    %1510 = vmatprep.subr.bf16.mxu0 0
    %1511 = vmatpush1.bf16.msra.mxu0 %v341
    %1512 = vmatprep.subr.bf16.mxu0 0
    %1513 = vmatpush1.bf16.msra.mxu0 %v340
    %1514 = vmatprep.subr.bf16.mxu0 0
    %1515 = vmatpush1.bf16.msra.mxu0 %v339
    %1516 = vmatprep.subr.bf16.mxu0 0
    %1517 = vmatpush1.bf16.msra.mxu0 %v338
    %1518 = vmatprep.subr.bf16.mxu0 0
    %1519 = vmatpush1.bf16.msra.mxu0 %v337
    %1520 = vmatprep.subr.bf16.mxu0 0
    %1521 = vmatpush1.bf16.msra.mxu0 %v336
    %1522 = vmatprep.subr.bf16.mxu0 0
    %1523 = vmatpush2.bf16.msra.mxu0 0
    %1524 = vmatprep.subr.bf16.mxu0 0
    %1525 = vmatpush2.bf16.msra.mxu0 0
    %1526 = vmatprep.subr.bf16.mxu0 0
    %1527 = vmatpush2.bf16.msra.mxu0 0
    %1528 = vmatprep.subr.bf16.mxu0 0
    %1529 = vmatpush2.bf16.msra.mxu0 0
    %1530 = vmatprep.subr.bf16.mxu0 0
    %1531 = vmatpush2.bf16.msra.mxu0 0
    %1532 = vmatprep.subr.bf16.mxu0 0
    %1533 = vmatpush2.bf16.msra.mxu0 0
    %1534 = vmatprep.subr.bf16.mxu0 0
    %1535 = vmatpush2.bf16.msra.mxu0 0
    %1536 = vmatprep.subr.bf16.mxu0 0
    %1537 = vmatpush2.bf16.msra.mxu0 0
    %1538 = vmatprep.mubr.bf16.mxu0 0
    %1539 = vmatmul.mubr.bf16.gmra.mxu0 %v1398
    %v1540 = vpop.f32.mrf.mxu0
    %v1541 = vadd.f32 %v1504, %v1540
    %v1542 = vpop.f32.mrf.mxu0
    %v1543 = vpop.f32.mrf.mxu0
    %v1544 = vadd.f32 %v1505, %v1543
    %v1545 = vpop.f32.mrf.mxu0
    %1546 = vdwg.mxu0
    %v1547 = vmul.f32 %v1541, 0.5
    %v1548 = vmul.f32 %v1544, 0.5
    %v1549 = vtanh.pop %v1547
    %v1550 = vtanh.pop %v1548
    %v1551 = vmul.f32 %v1549, 0.5
    %v1552 = vmul.f32 %v1550, 0.5
    %v1553 = vadd.f32 %v1551, 0.5
    %v1554 = vadd.f32 %v1552, 0.5
    %v1555 = vmul.f32 %v1553, %v1339
    %v1556 = vmul.f32 %v1554, %v1340
    %v1557 = vadd.f32 %v1555, %v1500
    %v1558 = vadd.f32 %v1556, %v1501
    %v1559 = vld [vmem:[%s1399 + $0x8] sm:$0xf]
    %v1560 = vld [vmem:[%s1399 + $0x18] sm:$0xf]
    %v1561 = vunpack.c.l.bf16 %v1559
    %v1562 = vunpack.c.l.bf16 %v1560
    %1563 = vmatprep.subr.bf16.mxu0 0
    %1564 = vmatpush1.bf16.msra.mxu0 %v464
    %1565 = vmatprep.subr.bf16.mxu0 0
    %1566 = vmatpush1.bf16.msra.mxu0 %v463
    %1567 = vmatprep.subr.bf16.mxu0 0
    %1568 = vmatpush1.bf16.msra.mxu0 %v462
    %1569 = vmatprep.subr.bf16.mxu0 0
    %1570 = vmatpush1.bf16.msra.mxu0 %v461
    %1571 = vmatprep.subr.bf16.mxu0 0
    %1572 = vmatpush1.bf16.msra.mxu0 %v460
    %1573 = vmatprep.subr.bf16.mxu0 0
    %1574 = vmatpush1.bf16.msra.mxu0 %v459
    %1575 = vmatprep.subr.bf16.mxu0 0
    %1576 = vmatpush1.bf16.msra.mxu0 %v458
    %1577 = vmatprep.subr.bf16.mxu0 0
    %1578 = vmatpush1.bf16.msra.mxu0 %v457
    %1579 = vmatprep.subr.bf16.mxu0 0
    %1580 = vmatpush2.bf16.msra.mxu0 0
    %1581 = vmatprep.subr.bf16.mxu0 0
    %1582 = vmatpush2.bf16.msra.mxu0 0
    %1583 = vmatprep.subr.bf16.mxu0 0
    %1584 = vmatpush2.bf16.msra.mxu0 0
    %1585 = vmatprep.subr.bf16.mxu0 0
    %1586 = vmatpush2.bf16.msra.mxu0 0
    %1587 = vmatprep.subr.bf16.mxu0 0
    %1588 = vmatpush2.bf16.msra.mxu0 0
    %1589 = vmatprep.subr.bf16.mxu0 0
    %1590 = vmatpush2.bf16.msra.mxu0 0
    %1591 = vmatprep.subr.bf16.mxu0 0
    %1592 = vmatpush2.bf16.msra.mxu0 0
    %1593 = vmatprep.subr.bf16.mxu0 0
    %1594 = vmatpush2.bf16.msra.mxu0 0
    %1595 = vmatprep.mubr.bf16.mxu0 0
    %1596 = vmatmul.mubr.bf16.gmra.mxu0 %v1398
    %v1597 = vpop.f32.mrf.mxu0
    %v1598 = vadd.f32 %v1561, %v1597
    %v1599 = vpop.f32.mrf.mxu0
    %v1600 = vpop.f32.mrf.mxu0
    %v1601 = vadd.f32 %v1562, %v1600
    %v1602 = vpop.f32.mrf.mxu0
    %1603 = vdwg.mxu0
    %v1604 = vmul.f32 %v1598, 0.5
    %v1605 = vmul.f32 %v1601, 0.5
    %v1606 = vtanh.pop %v1604
    %v1607 = vtanh.pop %v1605
    %v1608 = vmul.f32 %v1606, 0.5
    %v1609 = vmul.f32 %v1607, 0.5
    %v1610 = vadd.f32 %v1608, 0.5
    %v1611 = vadd.f32 %v1609, 0.5
    %v1612 = vtanh.pop %v1557
    %v1613 = vtanh.pop %v1558
    %v1614 = vmul.f32 %v1610, %v1612
    %v1615 = vmul.f32 %v1611, %v1613
    %v1616 = vpack.c.bf16 %v1615, %v1614
    %s1617 = scalar_lea.vmem [#allocation4], 192
    %v1618 = vld [vmem:[%s1617] sm:$0xf]
    %v1619 = vld [vmem:[%s1617 + $0x10] sm:$0xf]
    %v1620 = vunpack.c.l.bf16 %v1618
    %v1621 = vunpack.c.l.bf16 %v1619
    %1622 = vmatprep.subr.bf16.mxu0 0
    %1623 = vmatpush1.bf16.msra.mxu0 %v113
    %1624 = vmatprep.subr.bf16.mxu0 0
    %1625 = vmatpush1.bf16.msra.mxu0 %v112
    %1626 = vmatprep.subr.bf16.mxu0 0
    %1627 = vmatpush1.bf16.msra.mxu0 %v111
    %1628 = vmatprep.subr.bf16.mxu0 0
    %1629 = vmatpush1.bf16.msra.mxu0 %v110
    %1630 = vmatprep.subr.bf16.mxu0 0
    %1631 = vmatpush1.bf16.msra.mxu0 %v109
    %1632 = vmatprep.subr.bf16.mxu0 0
    %1633 = vmatpush1.bf16.msra.mxu0 %v108
    %1634 = vmatprep.subr.bf16.mxu0 0
    %1635 = vmatpush1.bf16.msra.mxu0 %v107
    %1636 = vmatprep.subr.bf16.mxu0 0
    %1637 = vmatpush1.bf16.msra.mxu0 %v106
    %1638 = vmatprep.subr.bf16.mxu0 0
    %1639 = vmatpush2.bf16.msra.mxu0 0
    %1640 = vmatprep.subr.bf16.mxu0 0
    %1641 = vmatpush2.bf16.msra.mxu0 0
    %1642 = vmatprep.subr.bf16.mxu0 0
    %1643 = vmatpush2.bf16.msra.mxu0 0
    %1644 = vmatprep.subr.bf16.mxu0 0
    %1645 = vmatpush2.bf16.msra.mxu0 0
    %1646 = vmatprep.subr.bf16.mxu0 0
    %1647 = vmatpush2.bf16.msra.mxu0 0
    %1648 = vmatprep.subr.bf16.mxu0 0
    %1649 = vmatpush2.bf16.msra.mxu0 0
    %1650 = vmatprep.subr.bf16.mxu0 0
    %1651 = vmatpush2.bf16.msra.mxu0 0
    %1652 = vmatprep.subr.bf16.mxu0 0
    %1653 = vmatpush2.bf16.msra.mxu0 0
    %1654 = vmatprep.mubr.bf16.mxu0 0
    %1655 = vmatmul.mubr.bf16.gmra.mxu0 %v1616
    %v1656 = vpop.f32.mrf.mxu0
    %v1657 = vadd.f32 %v1620, %v1656
    %v1658 = vpop.f32.mrf.mxu0
    %v1659 = vpop.f32.mrf.mxu0
    %v1660 = vadd.f32 %v1621, %v1659
    %v1661 = vpop.f32.mrf.mxu0
    %1662 = vdwg.mxu0
    %v1663 = vmul.f32 %v1657, 0.5
    %v1664 = vmul.f32 %v1660, 0.5
    %v1665 = vtanh.pop %v1663
    %v1666 = vtanh.pop %v1664
    %v1667 = vmul.f32 %v1665, 0.5
    %v1668 = vmul.f32 %v1666, 0.5
    %v1669 = vadd.f32 %v1667, 0.5
    %v1670 = vadd.f32 %v1668, 0.5
    %v1671 = vld [vmem:[%s1617 + $0xc] sm:$0xf]
    %v1672 = vld [vmem:[%s1617 + $0x1c] sm:$0xf]
    %v1673 = vunpack.c.l.bf16 %v1671
    %v1674 = vunpack.c.l.bf16 %v1672
    %1675 = vmatprep.subr.bf16.mxu0 0
    %1676 = vmatpush1.bf16.msra.mxu0 %v230
    %1677 = vmatprep.subr.bf16.mxu0 0
    %1678 = vmatpush1.bf16.msra.mxu0 %v229
    %1679 = vmatprep.subr.bf16.mxu0 0
    %1680 = vmatpush1.bf16.msra.mxu0 %v228
    %1681 = vmatprep.subr.bf16.mxu0 0
    %1682 = vmatpush1.bf16.msra.mxu0 %v227
    %1683 = vmatprep.subr.bf16.mxu0 0
    %1684 = vmatpush1.bf16.msra.mxu0 %v226
    %1685 = vmatprep.subr.bf16.mxu0 0
    %1686 = vmatpush1.bf16.msra.mxu0 %v225
    %1687 = vmatprep.subr.bf16.mxu0 0
    %1688 = vmatpush1.bf16.msra.mxu0 %v224
    %1689 = vmatprep.subr.bf16.mxu0 0
    %1690 = vmatpush1.bf16.msra.mxu0 %v223
    %1691 = vmatprep.subr.bf16.mxu0 0
    %1692 = vmatpush2.bf16.msra.mxu0 0
    %1693 = vmatprep.subr.bf16.mxu0 0
    %1694 = vmatpush2.bf16.msra.mxu0 0
    %1695 = vmatprep.subr.bf16.mxu0 0
    %1696 = vmatpush2.bf16.msra.mxu0 0
    %1697 = vmatprep.subr.bf16.mxu0 0
    %1698 = vmatpush2.bf16.msra.mxu0 0
    %1699 = vmatprep.subr.bf16.mxu0 0
    %1700 = vmatpush2.bf16.msra.mxu0 0
    %1701 = vmatprep.subr.bf16.mxu0 0
    %1702 = vmatpush2.bf16.msra.mxu0 0
    %1703 = vmatprep.subr.bf16.mxu0 0
    %1704 = vmatpush2.bf16.msra.mxu0 0
    %1705 = vmatprep.subr.bf16.mxu0 0
    %1706 = vmatpush2.bf16.msra.mxu0 0
    %1707 = vmatprep.mubr.bf16.mxu0 0
    %1708 = vmatmul.mubr.bf16.gmra.mxu0 %v1616
    %v1709 = vpop.f32.mrf.mxu0
    %v1710 = vadd.f32 %v1673, %v1709
    %v1711 = vpop.f32.mrf.mxu0
    %v1712 = vpop.f32.mrf.mxu0
    %v1713 = vadd.f32 %v1674, %v1712
    %v1714 = vpop.f32.mrf.mxu0
    %1715 = vdwg.mxu0
    %v1716 = vtanh.pop %v1710
    %v1717 = vtanh.pop %v1713
    %v1718 = vmul.f32 %v1669, %v1716
    %v1719 = vmul.f32 %v1670, %v1717
    %v1720 = vld [vmem:[%s1617 + $0x4] sm:$0xf]
    %v1721 = vld [vmem:[%s1617 + $0x14] sm:$0xf]
    %v1722 = vunpack.c.l.bf16 %v1720
    %v1723 = vunpack.c.l.bf16 %v1721
    %1724 = vmatprep.subr.bf16.mxu0 0
    %1725 = vmatpush1.bf16.msra.mxu0 %v343
    %1726 = vmatprep.subr.bf16.mxu0 0
    %1727 = vmatpush1.bf16.msra.mxu0 %v342
    %1728 = vmatprep.subr.bf16.mxu0 0
    %1729 = vmatpush1.bf16.msra.mxu0 %v341
    %1730 = vmatprep.subr.bf16.mxu0 0
    %1731 = vmatpush1.bf16.msra.mxu0 %v340
    %1732 = vmatprep.subr.bf16.mxu0 0
    %1733 = vmatpush1.bf16.msra.mxu0 %v339
    %1734 = vmatprep.subr.bf16.mxu0 0
    %1735 = vmatpush1.bf16.msra.mxu0 %v338
    %1736 = vmatprep.subr.bf16.mxu0 0
    %1737 = vmatpush1.bf16.msra.mxu0 %v337
    %1738 = vmatprep.subr.bf16.mxu0 0
    %1739 = vmatpush1.bf16.msra.mxu0 %v336
    %1740 = vmatprep.subr.bf16.mxu0 0
    %1741 = vmatpush2.bf16.msra.mxu0 0
    %1742 = vmatprep.subr.bf16.mxu0 0
    %1743 = vmatpush2.bf16.msra.mxu0 0
    %1744 = vmatprep.subr.bf16.mxu0 0
    %1745 = vmatpush2.bf16.msra.mxu0 0
    %1746 = vmatprep.subr.bf16.mxu0 0
    %1747 = vmatpush2.bf16.msra.mxu0 0
    %1748 = vmatprep.subr.bf16.mxu0 0
    %1749 = vmatpush2.bf16.msra.mxu0 0
    %1750 = vmatprep.subr.bf16.mxu0 0
    %1751 = vmatpush2.bf16.msra.mxu0 0
    %1752 = vmatprep.subr.bf16.mxu0 0
    %1753 = vmatpush2.bf16.msra.mxu0 0
    %1754 = vmatprep.subr.bf16.mxu0 0
    %1755 = vmatpush2.bf16.msra.mxu0 0
    %1756 = vmatprep.mubr.bf16.mxu0 0
    %1757 = vmatmul.mubr.bf16.gmra.mxu0 %v1616
    %v1758 = vpop.f32.mrf.mxu0
    %v1759 = vadd.f32 %v1722, %v1758
    %v1760 = vpop.f32.mrf.mxu0
    %v1761 = vpop.f32.mrf.mxu0
    %v1762 = vadd.f32 %v1723, %v1761
    %v1763 = vpop.f32.mrf.mxu0
    %1764 = vdwg.mxu0
    %v1765 = vmul.f32 %v1759, 0.5
    %v1766 = vmul.f32 %v1762, 0.5
    %v1767 = vtanh.pop %v1765
    %v1768 = vtanh.pop %v1766
    %v1769 = vmul.f32 %v1767, 0.5
    %v1770 = vmul.f32 %v1768, 0.5
    %v1771 = vadd.f32 %v1769, 0.5
    %v1772 = vadd.f32 %v1770, 0.5
    %v1773 = vmul.f32 %v1771, %v1557
    %v1774 = vmul.f32 %v1772, %v1558
    %v1775 = vadd.f32 %v1773, %v1718
    %v1776 = vadd.f32 %v1774, %v1719
    %v1777 = vld [vmem:[%s1617 + $0x8] sm:$0xf]
    %v1778 = vld [vmem:[%s1617 + $0x18] sm:$0xf]
    %v1779 = vunpack.c.l.bf16 %v1777
    %v1780 = vunpack.c.l.bf16 %v1778
    %1781 = vmatprep.subr.bf16.mxu0 0
    %1782 = vmatpush1.bf16.msra.mxu0 %v464
    %1783 = vmatprep.subr.bf16.mxu0 0
    %1784 = vmatpush1.bf16.msra.mxu0 %v463
    %1785 = vmatprep.subr.bf16.mxu0 0
    %1786 = vmatpush1.bf16.msra.mxu0 %v462
    %1787 = vmatprep.subr.bf16.mxu0 0
    %1788 = vmatpush1.bf16.msra.mxu0 %v461
    %1789 = vmatprep.subr.bf16.mxu0 0
    %1790 = vmatpush1.bf16.msra.mxu0 %v460
    %1791 = vmatprep.subr.bf16.mxu0 0
    %1792 = vmatpush1.bf16.msra.mxu0 %v459
    %1793 = vmatprep.subr.bf16.mxu0 0
    %1794 = vmatpush1.bf16.msra.mxu0 %v458
    %1795 = vmatprep.subr.bf16.mxu0 0
    %1796 = vmatpush1.bf16.msra.mxu0 %v457
    %1797 = vmatprep.subr.bf16.mxu0 0
    %1798 = vmatpush2.bf16.msra.mxu0 0
    %1799 = vmatprep.subr.bf16.mxu0 0
    %1800 = vmatpush2.bf16.msra.mxu0 0
    %1801 = vmatprep.subr.bf16.mxu0 0
    %1802 = vmatpush2.bf16.msra.mxu0 0
    %1803 = vmatprep.subr.bf16.mxu0 0
    %1804 = vmatpush2.bf16.msra.mxu0 0
    %1805 = vmatprep.subr.bf16.mxu0 0
    %1806 = vmatpush2.bf16.msra.mxu0 0
    %1807 = vmatprep.subr.bf16.mxu0 0
    %1808 = vmatpush2.bf16.msra.mxu0 0
    %1809 = vmatprep.subr.bf16.mxu0 0
    %1810 = vmatpush2.bf16.msra.mxu0 0
    %1811 = vmatprep.subr.bf16.mxu0 0
    %1812 = vmatpush2.bf16.msra.mxu0 0
    %1813 = vmatprep.mubr.bf16.mxu0 0
    %1814 = vmatmul.mubr.bf16.gmra.mxu0 %v1616
    %v1815 = vpop.f32.mrf.mxu0
    %v1816 = vadd.f32 %v1779, %v1815
    %v1817 = vpop.f32.mrf.mxu0
    %v1818 = vpop.f32.mrf.mxu0
    %v1819 = vadd.f32 %v1780, %v1818
    %v1820 = vpop.f32.mrf.mxu0
    %1821 = vdwg.mxu0
    %v1822 = vmul.f32 %v1816, 0.5
    %v1823 = vmul.f32 %v1819, 0.5
    %v1824 = vtanh.pop %v1822
    %v1825 = vtanh.pop %v1823
    %v1826 = vmul.f32 %v1824, 0.5
    %v1827 = vmul.f32 %v1825, 0.5
    %v1828 = vadd.f32 %v1826, 0.5
    %v1829 = vadd.f32 %v1827, 0.5
    %v1830 = vtanh.pop %v1775
    %v1831 = vtanh.pop %v1776
    %v1832 = vmul.f32 %v1828, %v1830
    %v1833 = vmul.f32 %v1829, %v1831
    %v1834 = vpack.c.bf16 %v1833, %v1832
    %s1835 = scalar_lea.vmem [#allocation4], 224
    %v1836 = vld [vmem:[%s1835] sm:$0xf]
    %v1837 = vld [vmem:[%s1835 + $0x10] sm:$0xf]
    %v1838 = vunpack.c.l.bf16 %v1836
    %v1839 = vunpack.c.l.bf16 %v1837
    %1840 = vmatprep.subr.bf16.mxu0 0
    %1841 = vmatpush1.bf16.msra.mxu0 %v113
    %1842 = vmatprep.subr.bf16.mxu0 0
    %1843 = vmatpush1.bf16.msra.mxu0 %v112
    %1844 = vmatprep.subr.bf16.mxu0 0
    %1845 = vmatpush1.bf16.msra.mxu0 %v111
    %1846 = vmatprep.subr.bf16.mxu0 0
    %1847 = vmatpush1.bf16.msra.mxu0 %v110
    %1848 = vmatprep.subr.bf16.mxu0 0
    %1849 = vmatpush1.bf16.msra.mxu0 %v109
    %1850 = vmatprep.subr.bf16.mxu0 0
    %1851 = vmatpush1.bf16.msra.mxu0 %v108
    %1852 = vmatprep.subr.bf16.mxu0 0
    %1853 = vmatpush1.bf16.msra.mxu0 %v107
    %1854 = vmatprep.subr.bf16.mxu0 0
    %1855 = vmatpush1.bf16.msra.mxu0 %v106
    %1856 = vmatprep.subr.bf16.mxu0 0
    %1857 = vmatpush2.bf16.msra.mxu0 0
    %1858 = vmatprep.subr.bf16.mxu0 0
    %1859 = vmatpush2.bf16.msra.mxu0 0
    %1860 = vmatprep.subr.bf16.mxu0 0
    %1861 = vmatpush2.bf16.msra.mxu0 0
    %1862 = vmatprep.subr.bf16.mxu0 0
    %1863 = vmatpush2.bf16.msra.mxu0 0
    %1864 = vmatprep.subr.bf16.mxu0 0
    %1865 = vmatpush2.bf16.msra.mxu0 0
    %1866 = vmatprep.subr.bf16.mxu0 0
    %1867 = vmatpush2.bf16.msra.mxu0 0
    %1868 = vmatprep.subr.bf16.mxu0 0
    %1869 = vmatpush2.bf16.msra.mxu0 0
    %1870 = vmatprep.subr.bf16.mxu0 0
    %1871 = vmatpush2.bf16.msra.mxu0 0
    %1872 = vmatprep.mubr.bf16.mxu0 0
    %1873 = vmatmul.mubr.bf16.gmra.mxu0 %v1834
    %v1874 = vpop.f32.mrf.mxu0
    %v1875 = vadd.f32 %v1838, %v1874
    %v1876 = vpop.f32.mrf.mxu0
    %v1877 = vpop.f32.mrf.mxu0
    %v1878 = vadd.f32 %v1839, %v1877
    %v1879 = vpop.f32.mrf.mxu0
    %1880 = vdwg.mxu0
    %v1881 = vmul.f32 %v1875, 0.5
    %v1882 = vmul.f32 %v1878, 0.5
    %v1883 = vtanh.pop %v1881
    %v1884 = vtanh.pop %v1882
    %v1885 = vmul.f32 %v1883, 0.5
    %v1886 = vmul.f32 %v1884, 0.5
    %v1887 = vadd.f32 %v1885, 0.5
    %v1888 = vadd.f32 %v1886, 0.5
    %v1889 = vld [vmem:[%s1835 + $0xc] sm:$0xf]
    %v1890 = vld [vmem:[%s1835 + $0x1c] sm:$0xf]
    %v1891 = vunpack.c.l.bf16 %v1889
    %v1892 = vunpack.c.l.bf16 %v1890
    %1893 = vmatprep.subr.bf16.mxu0 0
    %1894 = vmatpush1.bf16.msra.mxu0 %v230
    %1895 = vmatprep.subr.bf16.mxu0 0
    %1896 = vmatpush1.bf16.msra.mxu0 %v229
    %1897 = vmatprep.subr.bf16.mxu0 0
    %1898 = vmatpush1.bf16.msra.mxu0 %v228
    %1899 = vmatprep.subr.bf16.mxu0 0
    %1900 = vmatpush1.bf16.msra.mxu0 %v227
    %1901 = vmatprep.subr.bf16.mxu0 0
    %1902 = vmatpush1.bf16.msra.mxu0 %v226
    %1903 = vmatprep.subr.bf16.mxu0 0
    %1904 = vmatpush1.bf16.msra.mxu0 %v225
    %1905 = vmatprep.subr.bf16.mxu0 0
    %1906 = vmatpush1.bf16.msra.mxu0 %v224
    %1907 = vmatprep.subr.bf16.mxu0 0
    %1908 = vmatpush1.bf16.msra.mxu0 %v223
    %1909 = vmatprep.subr.bf16.mxu0 0
    %1910 = vmatpush2.bf16.msra.mxu0 0
    %1911 = vmatprep.subr.bf16.mxu0 0
    %1912 = vmatpush2.bf16.msra.mxu0 0
    %1913 = vmatprep.subr.bf16.mxu0 0
    %1914 = vmatpush2.bf16.msra.mxu0 0
    %1915 = vmatprep.subr.bf16.mxu0 0
    %1916 = vmatpush2.bf16.msra.mxu0 0
    %1917 = vmatprep.subr.bf16.mxu0 0
    %1918 = vmatpush2.bf16.msra.mxu0 0
    %1919 = vmatprep.subr.bf16.mxu0 0
    %1920 = vmatpush2.bf16.msra.mxu0 0
    %1921 = vmatprep.subr.bf16.mxu0 0
    %1922 = vmatpush2.bf16.msra.mxu0 0
    %1923 = vmatprep.subr.bf16.mxu0 0
    %1924 = vmatpush2.bf16.msra.mxu0 0
    %1925 = vmatprep.mubr.bf16.mxu0 0
    %1926 = vmatmul.mubr.bf16.gmra.mxu0 %v1834
    %v1927 = vpop.f32.mrf.mxu0
    %v1928 = vadd.f32 %v1891, %v1927
    %v1929 = vpop.f32.mrf.mxu0
    %v1930 = vpop.f32.mrf.mxu0
    %v1931 = vadd.f32 %v1892, %v1930
    %v1932 = vpop.f32.mrf.mxu0
    %1933 = vdwg.mxu0
    %v1934 = vtanh.pop %v1928
    %v1935 = vtanh.pop %v1931
    %v1936 = vmul.f32 %v1887, %v1934
    %v1937 = vmul.f32 %v1888, %v1935
    %v1938 = vld [vmem:[%s1835 + $0x4] sm:$0xf]
    %v1939 = vld [vmem:[%s1835 + $0x14] sm:$0xf]
    %v1940 = vunpack.c.l.bf16 %v1938
    %v1941 = vunpack.c.l.bf16 %v1939
    %1942 = vmatprep.subr.bf16.mxu0 0
    %1943 = vmatpush1.bf16.msra.mxu0 %v343
    %1944 = vmatprep.subr.bf16.mxu0 0
    %1945 = vmatpush1.bf16.msra.mxu0 %v342
    %1946 = vmatprep.subr.bf16.mxu0 0
    %1947 = vmatpush1.bf16.msra.mxu0 %v341
    %1948 = vmatprep.subr.bf16.mxu0 0
    %1949 = vmatpush1.bf16.msra.mxu0 %v340
    %1950 = vmatprep.subr.bf16.mxu0 0
    %1951 = vmatpush1.bf16.msra.mxu0 %v339
    %1952 = vmatprep.subr.bf16.mxu0 0
    %1953 = vmatpush1.bf16.msra.mxu0 %v338
    %1954 = vmatprep.subr.bf16.mxu0 0
    %1955 = vmatpush1.bf16.msra.mxu0 %v337
    %1956 = vmatprep.subr.bf16.mxu0 0
    %1957 = vmatpush1.bf16.msra.mxu0 %v336
    %1958 = vmatprep.subr.bf16.mxu0 0
    %1959 = vmatpush2.bf16.msra.mxu0 0
    %1960 = vmatprep.subr.bf16.mxu0 0
    %1961 = vmatpush2.bf16.msra.mxu0 0
    %1962 = vmatprep.subr.bf16.mxu0 0
    %1963 = vmatpush2.bf16.msra.mxu0 0
    %1964 = vmatprep.subr.bf16.mxu0 0
    %1965 = vmatpush2.bf16.msra.mxu0 0
    %1966 = vmatprep.subr.bf16.mxu0 0
    %1967 = vmatpush2.bf16.msra.mxu0 0
    %1968 = vmatprep.subr.bf16.mxu0 0
    %1969 = vmatpush2.bf16.msra.mxu0 0
    %1970 = vmatprep.subr.bf16.mxu0 0
    %1971 = vmatpush2.bf16.msra.mxu0 0
    %1972 = vmatprep.subr.bf16.mxu0 0
    %1973 = vmatpush2.bf16.msra.mxu0 0
    %1974 = vmatprep.mubr.bf16.mxu0 0
    %1975 = vmatmul.mubr.bf16.gmra.mxu0 %v1834
    %v1976 = vpop.f32.mrf.mxu0
    %v1977 = vadd.f32 %v1940, %v1976
    %v1978 = vpop.f32.mrf.mxu0
    %v1979 = vpop.f32.mrf.mxu0
    %v1980 = vadd.f32 %v1941, %v1979
    %v1981 = vpop.f32.mrf.mxu0
    %1982 = vdwg.mxu0
    %v1983 = vmul.f32 %v1977, 0.5
    %v1984 = vmul.f32 %v1980, 0.5
    %v1985 = vtanh.pop %v1983
    %v1986 = vtanh.pop %v1984
    %v1987 = vmul.f32 %v1985, 0.5
    %v1988 = vmul.f32 %v1986, 0.5
    %v1989 = vadd.f32 %v1987, 0.5
    %v1990 = vadd.f32 %v1988, 0.5
    %v1991 = vmul.f32 %v1989, %v1775
    %v1992 = vmul.f32 %v1990, %v1776
    %v1993 = vadd.f32 %v1991, %v1936
    %v1994 = vadd.f32 %v1992, %v1937
    %v1995 = vld [vmem:[%s1835 + $0x8] sm:$0xf]
    %v1996 = vld [vmem:[%s1835 + $0x18] sm:$0xf]
    %v1997 = vunpack.c.l.bf16 %v1995
    %v1998 = vunpack.c.l.bf16 %v1996
    %1999 = vmatprep.subr.bf16.mxu0 0
    %2000 = vmatpush1.bf16.msra.mxu0 %v464
    %2001 = vmatprep.subr.bf16.mxu0 0
    %2002 = vmatpush1.bf16.msra.mxu0 %v463
    %2003 = vmatprep.subr.bf16.mxu0 0
    %2004 = vmatpush1.bf16.msra.mxu0 %v462
    %2005 = vmatprep.subr.bf16.mxu0 0
    %2006 = vmatpush1.bf16.msra.mxu0 %v461
    %2007 = vmatprep.subr.bf16.mxu0 0
    %2008 = vmatpush1.bf16.msra.mxu0 %v460
    %2009 = vmatprep.subr.bf16.mxu0 0
    %2010 = vmatpush1.bf16.msra.mxu0 %v459
    %2011 = vmatprep.subr.bf16.mxu0 0
    %2012 = vmatpush1.bf16.msra.mxu0 %v458
    %2013 = vmatprep.subr.bf16.mxu0 0
    %2014 = vmatpush1.bf16.msra.mxu0 %v457
    %2015 = vmatprep.subr.bf16.mxu0 0
    %2016 = vmatpush2.bf16.msra.mxu0 0
    %2017 = vmatprep.subr.bf16.mxu0 0
    %2018 = vmatpush2.bf16.msra.mxu0 0
    %2019 = vmatprep.subr.bf16.mxu0 0
    %2020 = vmatpush2.bf16.msra.mxu0 0
    %2021 = vmatprep.subr.bf16.mxu0 0
    %2022 = vmatpush2.bf16.msra.mxu0 0
    %2023 = vmatprep.subr.bf16.mxu0 0
    %2024 = vmatpush2.bf16.msra.mxu0 0
    %2025 = vmatprep.subr.bf16.mxu0 0
    %2026 = vmatpush2.bf16.msra.mxu0 0
    %2027 = vmatprep.subr.bf16.mxu0 0
    %2028 = vmatpush2.bf16.msra.mxu0 0
    %2029 = vmatprep.subr.bf16.mxu0 0
    %2030 = vmatpush2.bf16.msra.mxu0 0
    %2031 = vmatprep.mubr.bf16.mxu0 0
    %2032 = vmatmul.mubr.bf16.gmra.mxu0 %v1834
    %v2033 = vpop.f32.mrf.mxu0
    %v2034 = vadd.f32 %v1997, %v2033
    %v2035 = vpop.f32.mrf.mxu0
    %v2036 = vpop.f32.mrf.mxu0
    %v2037 = vadd.f32 %v1998, %v2036
    %v2038 = vpop.f32.mrf.mxu0
    %2039 = vdwg.mxu0
    %v2040 = vmul.f32 %v2034, 0.5
    %v2041 = vmul.f32 %v2037, 0.5
    %v2042 = vtanh.pop %v2040
    %v2043 = vtanh.pop %v2041
    %v2044 = vmul.f32 %v2042, 0.5
    %v2045 = vmul.f32 %v2043, 0.5
    %v2046 = vadd.f32 %v2044, 0.5
    %v2047 = vadd.f32 %v2045, 0.5
    %v2048 = vtanh.pop %v1993
    %v2049 = vtanh.pop %v1994
    %v2050 = vmul.f32 %v2046, %v2048
    %v2051 = vmul.f32 %v2047, %v2049
    %2052 = vst [vmem:[#allocation2] sm:$0xff] %v2050
    %2053 = vst [vmem:[#allocation2 + $0x8] sm:$0xff] %v2051
    %2054 = vst [vmem:[#allocation3] sm:$0xff] %v1993
    %2055 = vst [vmem:[#allocation3 + $0x8] sm:$0xff] %v1994
    // Predicated region
    $region22: #{tpu_custom_call.1} parent=1 // pred_check
      %p2056 = pneg %p41
    $region23: #{tpu_custom_call.1} parent=1 // pred_check_branch
      %2058 = sbr.rel (%p2056) target = $region25
    $region24: #{tpu_custom_call.1} parent=1 // pred_region
      %2059 = vst [vmem:[#allocation9] sm:$0xff] %v2050
      %2060 = vst [vmem:[#allocation9 + $0x8] sm:$0xff] %v2051
    $region25: #{tpu_custom_call.1} parent=1 // pred_fallthru
      _
    // Predicated region
    $region26: #{tpu_custom_call.1} parent=1 // pred_check
      _
    $region27: #{tpu_custom_call.1} parent=1 // pred_check_branch
      %2062 = sbr.rel (0) target = $region29
    $region28: #{tpu_custom_call.1} parent=1 // pred_region
      %s2064 = ssub.s32 256, 256
      %2065 = vsyncadd [#allocation6], %s2064
      %s2066 = sshll.u32 [#allocation9], 4
      %s2067 = int_to_ptr.vmem [resolvable:$true] %s2066
      %2072 = dma.vmem_to_hbm [thread:$0]  %s2067, 256, %s2, [#allocation6], 128, 128, 8
    $region29: #{tpu_custom_call.1} parent=1 // pred_fallthru
      _
    // Predicated region
    $region30: #{tpu_custom_call.1} parent=1 // pred_check
      _
    $region31: #{tpu_custom_call.1} parent=1 // pred_check_branch
      %2074 = sbr.rel (0) target = $region33
    $region32: #{tpu_custom_call.1} parent=1 // pred_region
      %2075 = dma.done [#allocation6], 256
    $region33: #{tpu_custom_call.1} parent=1 // pred_fallthru
      _
    %2076 = vsyncpa [#allocation5], 1
    %2077 = vsyncpa [#allocation8], 1
    %2078 = vsyncpa [#allocation6], 1

</llo_original>
